<compile_context>
chip_gen: v7x
topology: tpu7x:2x2x1
jax: 0.10.0
libtpu: 0.0.40
codegen_flags: <defaults>
</compile_context>

<pallas_src>
import functools

import jax
import jax.numpy as jnp
from jax.experimental import pallas as pl
from jax.experimental.pallas import tpu as pltpu

NEG_SLOPE = 0.2   # LeakyReLU negative slope
DROP_P = 0.5      # Dropout probability (training mode)


def _round_up(x, m):
    return (x + m - 1) // m * m


def _hash_u32(x):
    """splitmix32-style integer hash (uint32 -> uint32); pure VPU ops.

    Only used as a fallback when the hardware PRNG is unavailable
    (interpret/CPU); on TPU the HW PRNG path below is used instead.
    """
    x = x ^ (x >> 16)
    x = x * jnp.uint32(0x7FEB352D)
    x = x ^ (x >> 15)
    x = x * jnp.uint32(0x846CA68B)
    x = x ^ (x >> 16)
    return x


def _generator_kernel(seed_ref, x_ref, w_ref, b_ref, o_ref, *,
                      training, use_hw_prng):
    # Linear: (TM, 2D) bf16 @ (2D, D) bf16 -> f32 accumulation on the MXU.
    # DEFAULT precision: single MXU pass (HIGHEST would force a 3-pass decomp).
    y = jnp.dot(x_ref[...], w_ref[...], preferred_element_type=jnp.float32)
    y = y + b_ref[...]

    # LeakyReLU(0.2)
    y = jnp.where(y > 0, y, NEG_SLOPE * y)

    if training:
        if use_hw_prng:
            # Hardware PRNG: independent stream per batch tile, deterministic
            # for a given (seed, tile) pair.
            pltpu.prng_seed(seed_ref[0], pl.program_id(0))
            bits = pltpu.bitcast(pltpu.prng_random_bits(o_ref.shape),
                                 jnp.uint32)
        else:
            # Counter-based hash fallback (interpret / CPU emulation).
            tm, d = o_ref.shape
            row = jax.lax.broadcasted_iota(jnp.uint32, (tm, d), 0)
            col = jax.lax.broadcasted_iota(jnp.uint32, (tm, d), 1)
            row_base = (pl.program_id(0) * tm).astype(jnp.uint32)
            gid = (row + row_base) * jnp.uint32(d) + col
            seed = seed_ref[0].astype(jnp.uint32) * jnp.uint32(0x9E3779B9)
            bits = _hash_u32(gid ^ seed)

        # Bernoulli(0.5) from bit 31; {0, 2} mask folds the 1/(1-p)=2 rescale
        # into the bit extraction -> one f32 multiply per element.
        mask2 = ((bits >> 30) & jnp.uint32(2)).astype(jnp.float32)
        y = y * mask2

    o_ref[...] = y.astype(o_ref.dtype)


def generator_forward(x, w_t, b, seed, *, training=True, block_m=512,
                      out_dtype=jnp.float32):
    """Generator.forward.

    x:   (B, 2*dim)    (any float dtype; streamed as bf16)
    w_t: (2*dim, dim)  (PyTorch weight (dim, 2*dim), pre-transposed)
    b:   (dim,)
    """
    B, two_dim = x.shape
    dim = w_t.shape[1]
    assert two_dim == 2 * dim and b.shape == (dim,)

    # Lane-dense output: pad the output feature dim to a multiple of 128 if the
    # caller's dim is not lane-aligned (unmasked vst), slice back afterwards.
    dim_p = _round_up(dim, 128)
    if dim_p != dim:
        w_t = jnp.pad(w_t, ((0, 0), (0, dim_p - dim)))
        b = jnp.pad(b, (0, dim_p - dim))

    # bf16 operand streams (f32 accumulation) -> halves dominant HBM traffic.
    # (Ideally the caller already supplies bf16 activations/weights.)
    x = x.astype(jnp.bfloat16)
    w_t = w_t.astype(jnp.bfloat16)
    b2d = b.astype(jnp.float32).reshape(1, dim_p)

    # Batch tile: largest tile <= block_m that still yields >=2 grid steps
    # (v7x megacore), multiple of 8 sublanes.  No host padding of B -- the
    # ragged last block is masked by Pallas.
    tm = min(block_m, _round_up(pl.cdiv(B, 2), 8))
    tm = max(8, (tm // 8) * 8)
    if tm >= B:
        tm = B  # single full-extent tile (satisfies the block-shape rule)
    grid = (pl.cdiv(B, tm),)

    seed_arr = jnp.asarray([seed], dtype=jnp.int32)
    use_hw_prng = jax.default_backend() == "tpu"

    # Explicit VMEM budget: resident W + bias, double-buffered x and out tiles.
    w_bytes = two_dim * dim_p * 2                       # bf16, resident
    x_bytes = 2 * tm * two_dim * 2                      # bf16, double-buffered
    o_bytes = 2 * tm * dim_p * jnp.dtype(out_dtype).itemsize
    vmem_need = w_bytes + x_bytes + o_bytes + dim_p * 4
    vmem_limit = int(min(64 << 20, max(32 << 20, 2 * vmem_need)))

    grid_spec = pltpu.PrefetchScalarGridSpec(
        num_scalar_prefetch=1,           # seed -> SMEM
        grid=grid,
        in_specs=[
            pl.BlockSpec((tm, two_dim), lambda i, s: (i, 0)),    # x tile
            pl.BlockSpec((two_dim, dim_p), lambda i, s: (0, 0)),  # W (resident)
            pl.BlockSpec((1, dim_p), lambda i, s: (0, 0)),        # bias (resident)
        ],
        out_specs=pl.BlockSpec((tm, dim_p), lambda i, s: (i, 0)),
    )

    out = pl.pallas_call(
        functools.partial(_generator_kernel, training=training,
                          use_hw_prng=use_hw_prng),
        out_shape=jax.ShapeDtypeStruct((B, dim_p), out_dtype),
        grid_spec=grid_spec,
        compiler_params=pltpu.CompilerParams(
            dimension_semantics=("parallel",),
            vmem_limit_bytes=vmem_limit),
    )(seed_arr, x, w_t, b2d)

    return out[:, :dim] if dim_p != dim else out


if __name__ == "__main__":
    dim = 256
    batch = 300      # ragged batch: exercises the no-pad partial last tile
    block_m = 128    # -> grid of 3 batch tiles (pipelining + per-tile PRNG)

    key = jax.random.PRNGKey(0)
    kx, kw, kb = jax.random.split(key, 3)

    x = jax.random.normal(kx, (batch, 2 * dim), dtype=jnp.float32)

    # PyTorch nn.Linear-style init: U(-1/sqrt(fan_in), 1/sqrt(fan_in)).
    bound = 1.0 / jnp.sqrt(jnp.float32(2 * dim))
    w = jax.random.uniform(kw, (dim, 2 * dim), minval=-bound, maxval=bound,
                           dtype=jnp.float32)          # PyTorch layout (out, in)
    b = jax.random.uniform(kb, (dim,), minval=-bound, maxval=bound,
                           dtype=jnp.float32)
    w_t = w.T                                          # (2*dim, dim) for x @ W

    out_train = generator_forward(x, w_t, b, seed=0, training=True,
                                  block_m=block_m)
    out_eval = generator_forward(x, w_t, b, seed=0, training=False,
                                 block_m=block_m)
    jax.block_until_ready((out_train, out_eval))

    # Reference with matching bf16 operands / f32 accumulation
    # (eval mode: dropout == identity).
    ref = jnp.dot(x.astype(jnp.bfloat16), w_t.astype(jnp.bfloat16),
                  preferred_element_type=jnp.float32) + b
    ref = jnp.where(ref > 0, ref, NEG_SLOPE * ref)
    assert out_eval.shape == (batch, dim)
    assert jnp.allclose(out_eval, ref, atol=2e-3, rtol=2e-3), "eval-mode mismatch"

    # Training mode: survivors scaled by exactly 2x, ~50% dropped, and the
    # first two batch tiles get different dropout masks.
    kept = out_train != 0
    drop_frac = float(1.0 - jnp.mean(kept.astype(jnp.float32)))
    assert 0.45 < drop_frac < 0.55, f"unexpected drop fraction {drop_frac}"
    err = jnp.where(kept, out_train - 2.0 * out_eval, 0.0)
    assert jnp.allclose(err, 0.0, atol=1e-5), "survivor scaling mismatch"
    mask0 = kept[:block_m]
    mask1 = kept[block_m:2 * block_m]
    assert not bool(jnp.all(mask0 == mask1)), "identical dropout mask across tiles"

    print("KERNEL_OK")
</pallas_src>

<mosaic_0001>
module attributes {stable_mosaic.version = 11 : i64} {
  func.func @_generator_kernel(%arg0: i32, %arg1: memref<1xi32, #tpu.memory_space<smem>>, %arg2: memref<128x512xbf16, #tpu.memory_space<vmem>>, %arg3: memref<512x256xbf16, #tpu.memory_space<vmem>>, %arg4: memref<1x256xf32, #tpu.memory_space<vmem>>, %arg5: memref<128x256xf32, #tpu.memory_space<vmem>>) attributes {dimension_semantics = [#tpu.dimension_semantics<parallel>], iteration_bounds = array<i64: 3>, scalar_prefetch = 1 : i64, scratch_operands = 0 : i64, tpu.core_type = #tpu.core_type<tc>, window_params = [{transform_indices = @transform_0, window_bounds = array<i64: 128, 512>}, {pipeline_mode = #tpu.pipeline_mode<synchronous>, transform_indices = @transform_1, window_bounds = array<i64: 512, 256>}, {pipeline_mode = #tpu.pipeline_mode<synchronous>, transform_indices = @transform_2, window_bounds = array<i64: 1, 256>}, {transform_indices = @transform_3, window_bounds = array<i64: 128, 256>}]} {
    %c0 = arith.constant 0 : index
    %c0_0 = arith.constant 0 : index
    %0 = vector.load %arg2[%c0, %c0_0] : memref<128x512xbf16, #tpu.memory_space<vmem>>, vector<128x512xbf16>
    %c0_1 = arith.constant 0 : index
    %c0_2 = arith.constant 0 : index
    %1 = vector.load %arg3[%c0_1, %c0_2] : memref<512x256xbf16, #tpu.memory_space<vmem>>, vector<512x256xbf16>
    %cst = arith.constant dense<0.000000e+00> : vector<128x256xf32>
    %2 = tpu.matmul %0, %1, %cst {dimension_numbers = #tpu.dot_dimension_numbers<[1], [0], [0], [1], [0, 0, 1, 1], [], []>} : vector<128x512xbf16>, vector<512x256xbf16>, vector<128x256xf32> -> vector<128x256xf32>
    %c0_3 = arith.constant 0 : index
    %c0_4 = arith.constant 0 : index
    %3 = vector.load %arg4[%c0_3, %c0_4] : memref<1x256xf32, #tpu.memory_space<vmem>>, vector<1x256xf32>
    %4 = vector.broadcast %3 : vector<1x256xf32> to vector<128x256xf32>
    %5 = arith.addf %2, %4 : vector<128x256xf32>
    %cst_5 = arith.constant 0.000000e+00 : f32
    %6 = vector.broadcast %cst_5 : f32 to vector<128x256xf32>
    %7 = arith.cmpf ogt, %5, %6 : vector<128x256xf32>
    %cst_6 = arith.constant 2.000000e-01 : f32
    %8 = vector.broadcast %cst_6 : f32 to vector<128x256xf32>
    %9 = arith.mulf %8, %5 : vector<128x256xf32>
    %10 = arith.select %7, %5, %9 : vector<128x256xi1>, vector<128x256xf32>
    %11 = tpu.iota {dimensions = array<i32: 0>} : vector<128x256xi32>
    %12 = tpu.iota {dimensions = array<i32: 1>} : vector<128x256xi32>
    %c128_i32 = arith.constant 128 : i32
    %13 = arith.muli %arg0, %c128_i32 : i32
    %14 = vector.broadcast %13 : i32 to vector<128x256xi32>
    %15 = arith.addi %11, %14 : vector<128x256xi32>
    %c256_i32 = arith.constant 256 : i32
    %16 = vector.broadcast %c256_i32 : i32 to vector<128x256xi32>
    %17 = arith.muli %15, %16 : vector<128x256xi32>
    %18 = arith.addi %17, %12 : vector<128x256xi32>
    %c0_7 = arith.constant 0 : index
    %19 = memref.load %arg1[%c0_7] : memref<1xi32, #tpu.memory_space<smem>>
    %c-1640531527_i32 = arith.constant -1640531527 : i32
    %20 = arith.muli %19, %c-1640531527_i32 : i32
    %21 = vector.broadcast %20 : i32 to vector<128x256xi32>
    %22 = arith.xori %18, %21 : vector<128x256xi32>
    %c16_i32 = arith.constant 16 : i32
    %23 = vector.broadcast %c16_i32 : i32 to vector<128x256xi32>
    %24 = arith.shrui %22, %23 : vector<128x256xi32>
    %25 = arith.xori %22, %24 : vector<128x256xi32>
    %c2146121005_i32 = arith.constant 2146121005 : i32
    %26 = vector.broadcast %c2146121005_i32 : i32 to vector<128x256xi32>
    %27 = arith.muli %25, %26 : vector<128x256xi32>
    %c15_i32 = arith.constant 15 : i32
    %28 = vector.broadcast %c15_i32 : i32 to vector<128x256xi32>
    %29 = arith.shrui %27, %28 : vector<128x256xi32>
    %30 = arith.xori %27, %29 : vector<128x256xi32>
    %c-2073254261_i32 = arith.constant -2073254261 : i32
    %31 = vector.broadcast %c-2073254261_i32 : i32 to vector<128x256xi32>
    %32 = arith.muli %30, %31 : vector<128x256xi32>
    %c16_i32_8 = arith.constant 16 : i32
    %33 = vector.broadcast %c16_i32_8 : i32 to vector<128x256xi32>
    %34 = arith.shrui %32, %33 : vector<128x256xi32>
    %35 = arith.xori %32, %34 : vector<128x256xi32>
    %c30_i32 = arith.constant 30 : i32
    %36 = vector.broadcast %c30_i32 : i32 to vector<128x256xi32>
    %37 = arith.shrui %35, %36 : vector<128x256xi32>
    %c2_i32 = arith.constant 2 : i32
    %38 = vector.broadcast %c2_i32 : i32 to vector<128x256xi32>
    %39 = arith.andi %37, %38 : vector<128x256xi32>
    %40 = arith.uitofp %39 : vector<128x256xi32> to vector<128x256xf32>
    %41 = arith.mulf %10, %40 : vector<128x256xf32>
    %c0_9 = arith.constant 0 : index
    %c0_10 = arith.constant 0 : index
    %42 = vector.load %arg5[%c0_9, %c0_10] : memref<128x256xf32, #tpu.memory_space<vmem>>, vector<128x256xf32>
    tpu.vector_store %arg5[%c0_9, %c0_10], %41 {strides = array<i32>} : memref<128x256xf32, #tpu.memory_space<vmem>>, vector<128x256xf32>,
    return
  }
  func.func @transform_0(%arg0: i32, %arg1: memref<1xi32, #tpu.memory_space<smem>>) -> (i32, i32) {
    %c0_i32 = arith.constant 0 : i32
    %c0_i32_0 = arith.constant 0 : i32
    return %arg0, %c0_i32 : i32, i32
  }
  func.func @transform_1(%arg0: i32, %arg1: memref<1xi32, #tpu.memory_space<smem>>) -> (i32, i32) {
    %c0_i32 = arith.constant 0 : i32
    %c0_i32_0 = arith.constant 0 : i32
    %c0_i32_1 = arith.constant 0 : i32
    return %c0_i32, %c0_i32_0 : i32, i32
  }
  func.func @transform_2(%arg0: i32, %arg1: memref<1xi32, #tpu.memory_space<smem>>) -> (i32, i32) {
    %c0_i32 = arith.constant 0 : i32
    %c0_i32_0 = arith.constant 0 : i32
    %c0_i32_1 = arith.constant 0 : i32
    return %c0_i32, %c0_i32_0 : i32, i32
  }
  func.func @transform_3(%arg0: i32, %arg1: memref<1xi32, #tpu.memory_space<smem>>) -> (i32, i32) {
    %c0_i32 = arith.constant 0 : i32
    %c0_i32_0 = arith.constant 0 : i32
    return %arg0, %c0_i32 : i32, i32
  }
}

</mosaic_0001>

<llo_original>
// kernel: tpu_custom_call.1
$region0: #{tpu_custom_call.1}
  #allocation0 [shape = 'u32[]', space=smem, size = 0x4, offset = 0x4, fixed_abs, tag = 'smem constant byte address 0x4 - core index']
  #allocation1 [shape = 'u32[144,128]{1,0:T(1,128)}', space=vmem, size = 0x12000, scoped, tag = 'internal scratch']
  #allocation2 [shape = 's32[1]{0}', space=sflag, size = 0x4, scoped, tag = 'scoped memory for tpu_custom_call.1']
  #allocation3 [shape = 's32[1]{0:T(128)S(6)}', space=smem, size = 0x200, scoped, tag = 'prefetched SMEM operand 0']
  %s0 = inlined_call_operand.<no memory space> [shape: s32[1], index: 0, kind: input, shape index: {}]
  %s1 = inlined_call_operand.hbm [shape: bf16[300,512], index: 1, kind: input, shape index: {}]
  %s2 = inlined_call_operand.hbm [shape: bf16[512,256], index: 2, kind: input, shape index: {}]
  %s3 = inlined_call_operand.vmem [shape: f32[1,256], index: 3, kind: input, shape index: {}]
  %s4 = inlined_call_operand.hbm [shape: f32[300,256], index: 4, kind: output, shape index: {}]
  %s5 = sld [smem:[#allocation0]]
  $region53: #{tpu_custom_call.1} parent=0
    _
  %s7 = ssub.s32 1, %s5
  %s8 = scalar_select 0, %s7, %s5
  %9 = sst [smem:[#allocation3]] %s0
  $region1: #{tpu_custom_call.1} parent=0
    #allocation4 [shape = 'u8[262144]{0}', space=vmem, size = 0x40000, scoped, tag = 'input window, operand 1']
    #allocation5 [shape = 's32[2]{0}', space=sflag, size = 0x8, scoped, tag = 'scoped memory for tpu_custom_call.1']
    #allocation6 [shape = 's32[2]{0}', space=sflag, size = 0x8, scoped, tag = 'scoped memory for tpu_custom_call.1']
    #allocation7 [shape = 'u8[262144]{0}', space=vmem, size = 0x40000, scoped, tag = 'input window, operand 2, single buffered']
    #allocation8 [shape = 's32[1]{0}', space=sflag, size = 0x4, scoped, tag = 'scoped memory for tpu_custom_call.1']
    #allocation9 [shape = 'u8[262144]{0}', space=vmem, size = 0x40000, scoped, tag = 'output window, operand 0']
    %10 = vsyncpa [#allocation5], 0
    %s11 = scalar_lea.sflag [#allocation5], 1
    %12 = vsyncpa %s11, 0
    %13 = vsyncpa [#allocation8], 0
    %14 = vsyncpa [#allocation6], 0
    %s15 = scalar_lea.sflag [#allocation6], 1
    %16 = vsyncpa %s15, 0
    loop: start=0, step=1, limit=5
    $region2: #{tpu_custom_call.1} parent=1 // loop_pre_header
      _
    $region3: #{tpu_custom_call.1} parent=1 // loop_header
      %s18 = sphi 0, %s22
      %p19 = scmp.ge.s32.totalorder %s18, 5
      %s28 = sphi 0, %s30
      %s31 = sphi 0, %s28
      %s32 = sphi 0, %s31
      %s48 = sphi 0, %s32
      %s52 = sphi 0, %s52
      %s54 = sphi 0, %s52
      %s55 = sphi 0, %s54
      %s69 = sphi 0, %s55
      %s73 = sphi 0, %s73
      %s75 = sphi 0, %s73
      %s76 = sphi 0, %s75
      %s90 = sphi 0, %s76
      %s96 = sphi 0, %s98
      %s99 = sphi 0, %s96
      %s100 = sphi 0, %s99
      %s116 = sphi 0, %s100
    $region4: #{tpu_custom_call.1} parent=1 // loop_header_branch
      %21 = sbr.rel (%p19) target = $region8
    $region5: #{tpu_custom_call.1} parent=1 // loop_body
      %s23 = ssub.s32 %s18, 1
      %s24 = ssub.s32 %s18, 2
      %s25 = sadd.s32 %s18, 1
      %s26 = ssub.s32 %s18, %s25
      %p27 = scmp.eq.s32.totalorder %s26, 0
      %s29 = sadd.s32 %s28, 1
      %s30 = scalar_select %p27, %s28, %s29
      %p33 = pneg %p27
      %p34 = scmp.eq.s32.totalorder %s18, 2
      %p35 = por %p33, %p34
      %p36 = scmp.ne.s32.totalorder %s28, %s31
      %p37 = scmp.eq.s32.totalorder %s18, 0
      %p38 = por %p36, %p37
      %p39 = scmp.ne.s32.totalorder %s28, %s31
      %p40 = scmp.eq.s32.totalorder %s23, 2
      %p41 = por %p39, %p40
      %p42 = scmp.ne.s32.totalorder %s31, %s32
      %p43 = scmp.eq.s32.totalorder %s23, 0
      %p44 = por %p42, %p43
      %p45 = scmp.ne.s32.totalorder %s31, %s32
      %p46 = scmp.eq.s32.totalorder %s24, 2
      %p47 = por %p45, %p46
      %p49 = scmp.ne.s32.totalorder %s32, %s48
      %p50 = scmp.eq.s32.totalorder %s24, 0
      %p51 = por %p49, %p50
      %s53 = sadd.s32 %s52, 1
      %p56 = scmp.eq.s32.totalorder %s18, 2
      %p57 = scmp.ne.s32.totalorder %s52, %s54
      %p58 = scmp.eq.s32.totalorder %s18, 0
      %p59 = por %p57, %p58
      %p60 = scmp.ne.s32.totalorder %s52, %s54
      %p61 = scmp.eq.s32.totalorder %s23, 2
      %p62 = por %p60, %p61
      %p63 = scmp.ne.s32.totalorder %s54, %s55
      %p64 = scmp.eq.s32.totalorder %s23, 0
      %p65 = por %p63, %p64
      %p66 = scmp.ne.s32.totalorder %s54, %s55
      %p67 = scmp.eq.s32.totalorder %s24, 2
      %p68 = por %p66, %p67
      %p70 = scmp.ne.s32.totalorder %s55, %s69
      %p71 = scmp.eq.s32.totalorder %s24, 0
      %p72 = por %p70, %p71
      %s74 = sadd.s32 %s73, 1
      %p77 = scmp.eq.s32.totalorder %s18, 2
      %p78 = scmp.ne.s32.totalorder %s73, %s75
      %p79 = scmp.eq.s32.totalorder %s18, 0
      %p80 = por %p78, %p79
      %p81 = scmp.ne.s32.totalorder %s73, %s75
      %p82 = scmp.eq.s32.totalorder %s23, 2
      %p83 = por %p81, %p82
      %p84 = scmp.ne.s32.totalorder %s75, %s76
      %p85 = scmp.eq.s32.totalorder %s23, 0
      %p86 = por %p84, %p85
      %p87 = scmp.ne.s32.totalorder %s75, %s76
      %p88 = scmp.eq.s32.totalorder %s24, 2
      %p89 = por %p87, %p88
      %p91 = scmp.ne.s32.totalorder %s76, %s90
      %p92 = scmp.eq.s32.totalorder %s24, 0
      %p93 = por %p91, %p92
      %s94 = ssub.s32 %s18, %s25
      %p95 = scmp.eq.s32.totalorder %s94, 0
      %s97 = sadd.s32 %s96, 1
      %s98 = scalar_select %p95, %s96, %s97
      %p101 = pneg %p95
      %p102 = scmp.eq.s32.totalorder %s18, 2
      %p103 = por %p101, %p102
      %p104 = scmp.ne.s32.totalorder %s96, %s99
      %p105 = scmp.eq.s32.totalorder %s18, 0
      %p106 = por %p104, %p105
      %p107 = scmp.ne.s32.totalorder %s96, %s99
      %p108 = scmp.eq.s32.totalorder %s23, 2
      %p109 = por %p107, %p108
      %p110 = scmp.ne.s32.totalorder %s99, %s100
      %p111 = scmp.eq.s32.totalorder %s23, 0
      %p112 = por %p110, %p111
      %p113 = scmp.ne.s32.totalorder %s99, %s100
      %p114 = scmp.eq.s32.totalorder %s24, 2
      %p115 = por %p113, %p114
      %p117 = scmp.ne.s32.totalorder %s100, %s116
      %p118 = scmp.eq.s32.totalorder %s24, 0
      %p119 = por %p117, %p118
      %p120 = scmp.le.s32.totalorder 1, %s18
      %p121 = scmp.lt.s32.totalorder %s18, 4
      %p122 = pnand %p120, %p121
      %p123 = pneg %p122
      // Predicated region
      $region9: #{tpu_custom_call.1} parent=5 // pred_check
        _
      $region10: #{tpu_custom_call.1} parent=5 // pred_check_branch
        %125 = sbr.rel (%p122) target = $region12
      $region11: #{tpu_custom_call.1} parent=5 // pred_region
        %s126 = ssub.s32 %s18, 1
        // Predicated region
        $region13: #{tpu_custom_call.1} parent=11 // pred_check
          %p127 = pneg %p65
        $region14: #{tpu_custom_call.1} parent=11 // pred_check_branch
          %129 = sbr.rel (%p127) target = $region16
        $region15: #{tpu_custom_call.1} parent=11 // pred_region
          %s131 = ssub.s32 8192, 8192
          %132 = vsyncadd [#allocation8], %s131
          %s133 = sshll.u32 [#allocation7], 4
          %s134 = int_to_ptr.vmem [resolvable:$true] %s133
          %139 = dma.hbm_to_vmem [thread:$0]  %s2, 8192, %s134, [#allocation8], 128, 128, 8
        $region16: #{tpu_custom_call.1} parent=11 // pred_fallthru
          _
        // Predicated region
        $region17: #{tpu_custom_call.1} parent=11 // pred_check
          %p140 = pneg %p86
        $region18: #{tpu_custom_call.1} parent=11 // pred_check_branch
          %142 = sbr.rel (%p140) target = $region20
        $region19: #{tpu_custom_call.1} parent=11 // pred_region
          _
        $region20: #{tpu_custom_call.1} parent=11 // pred_fallthru
          _
      $region12: #{tpu_custom_call.1} parent=5 // pred_fallthru
        _
      %p143 = scmp.lt.s32.totalorder %s18, 3
      // Predicated region
      $region21: #{tpu_custom_call.1} parent=5 // pred_check
        %p144 = pneg %p143
      $region22: #{tpu_custom_call.1} parent=5 // pred_check_branch
        %146 = sbr.rel (%p144) target = $region24
      $region23: #{tpu_custom_call.1} parent=5 // pred_region
        // Predicated region
        $region25: #{tpu_custom_call.1} parent=23 // pred_check
          %p147 = pneg %p38
        $region26: #{tpu_custom_call.1} parent=23 // pred_check_branch
          %149 = sbr.rel (%p147) target = $region28
        $region27: #{tpu_custom_call.1} parent=23 // pred_region
          %s150 = sand.u32 %s28, 1
          %s151 = scalar_lea.sflag [#allocation5], %s150
          %s152 = sand.u32 %s28, 1
          %s153 = smul.addr %s152, 256
          %s154 = scalar_lea.vmem [#allocation4], %s153
          %s155 = smul.u32 16, %s18
          %s156 = ssub.s32 38, %s155
          %p157 = scmp.lt.s32.totalorder %s156, 16
          %s158 = scalar_select %p157, %s156, 16
          %s159 = smul.u32 64, %s158
          %s160 = smul.u32 %s159, 4
          %s162 = ssub.s32 4096, %s160
          %163 = vsyncadd %s151, %s162
          %p164 = scmp.ne.s32.totalorder 0, %s160
          %s165 = smul.addr %s155, 4
          %s166 = smul.addr %s165, 64
          %s167 = scalar_lea.hbm %s1, %s166
          %s168 = smul.u32 16, %s158
          %s169 = sshll.u32 %s154, 4
          %s170 = int_to_ptr.vmem [resolvable:$true] %s169
          %s171 = sshll.u32 %s168, 4
          %175 = dma.hbm_to_vmem [thread:$0]  (%p164), %s167, %s171, %s170, %s151, 256, 256, 16
        $region28: #{tpu_custom_call.1} parent=23 // pred_fallthru
          _
      $region24: #{tpu_custom_call.1} parent=5 // pred_fallthru
        _
      %p176 = scmp.le.s32.totalorder 1, %s18
      %p177 = scmp.lt.s32.totalorder %s18, 4
      %p178 = pnand %p176, %p177
      %p179 = pneg %p178
      // Predicated region
      $region29: #{tpu_custom_call.1} parent=5 // pred_check
        _
      $region30: #{tpu_custom_call.1} parent=5 // pred_check_branch
        %181 = sbr.rel (%p178) target = $region32
      $region31: #{tpu_custom_call.1} parent=5 // pred_region
        %s182 = ssub.s32 %s18, 1
        %s183 = sand.u32 %s31, 1
        %s184 = scalar_lea.sflag [#allocation5], %s183
        %s185 = sand.u32 %s31, 1
        %s186 = smul.addr %s185, 256
        %s187 = scalar_lea.vmem [#allocation4], %s186
        // Predicated region
        $region33: #{tpu_custom_call.1} parent=31 // pred_check
          %p188 = pneg %p44
        $region34: #{tpu_custom_call.1} parent=31 // pred_check_branch
          %190 = sbr.rel (%p188) target = $region36
        $region35: #{tpu_custom_call.1} parent=31 // pred_region
          %191 = dma.done %s184, 4096
        $region36: #{tpu_custom_call.1} parent=31 // pred_fallthru
          _
        // Predicated region
        $region37: #{tpu_custom_call.1} parent=31 // pred_check
          %p192 = pneg %p65
        $region38: #{tpu_custom_call.1} parent=31 // pred_check_branch
          %194 = sbr.rel (%p192) target = $region40
        $region39: #{tpu_custom_call.1} parent=31 // pred_region
          %195 = dma.done [#allocation8], 8192
        $region40: #{tpu_custom_call.1} parent=31 // pred_fallthru
          _
        %s196 = sand.u32 %s31, 1
        %s197 = scalar_lea.sflag [#allocation5], %s196
        %s198 = sand.u32 %s31, 1
        %s199 = smul.addr %s198, 256
        %s200 = scalar_lea.vmem [#allocation4], %s199
        %p201 = pneg %p44
        %p202 = pneg %p41
        %p203 = pneg %p65
        %p204 = pneg %p62
        %p205 = pneg %p86
        %p206 = pneg %p83
        %p207 = pneg %p112
        %p208 = pneg %p109
        %s209 = sand.u32 %s99, 1
        %s210 = scalar_lea.sflag [#allocation6], %s209
        %s211 = sand.u32 %s99, 1
        %s212 = smul.addr %s211, 256
        %s213 = scalar_lea.vmem [#allocation9], %s212
        %s214 = smul.u32 16, %s23
        %s215 = ssub.s32 38, %s214
        %p216 = scmp.lt.s32.totalorder %s215, 16
        %s217 = scalar_select %p216, %s215, 16
        %s218 = smul.u32 64, %s217
        %s219 = smul.u32 %s218, 4
        %s220 = smul.u32 16, %s23
        %s221 = ssub.s32 38, %s220
        %p222 = scmp.lt.s32.totalorder %s221, 16
        %s223 = scalar_select %p222, %s221, 16
        %s224 = smul.u32 128, %s223
        %s225 = smul.u32 %s224, 2
        %v226 = vld [vmem:[%s187] sm:$0xff]
        %v227 = vld [vmem:[%s187 + $0x8] sm:$0xff]
        %v228 = vld [vmem:[%s187 + $0x10] sm:$0xff]
        %v229 = vld [vmem:[%s187 + $0x18] sm:$0xff]
        %v230 = vld [vmem:[%s187 + $0x20] sm:$0xff]
        %v231 = vld [vmem:[%s187 + $0x28] sm:$0xff]
        %v232 = vld [vmem:[%s187 + $0x30] sm:$0xff]
        %v233 = vld [vmem:[%s187 + $0x38] sm:$0xff]
        %v234 = vld [vmem:[%s187 + $0x40] sm:$0xff]
        %v235 = vld [vmem:[%s187 + $0x48] sm:$0xff]
        %v236 = vld [vmem:[%s187 + $0x50] sm:$0xff]
        %v237 = vld [vmem:[%s187 + $0x58] sm:$0xff]
        %v238 = vld [vmem:[%s187 + $0x60] sm:$0xff]
        %v239 = vld [vmem:[%s187 + $0x68] sm:$0xff]
        %v240 = vld [vmem:[%s187 + $0x70] sm:$0xff]
        %v241 = vld [vmem:[%s187 + $0x78] sm:$0xff]
        %v242 = vld [vmem:[%s187 + $0x80] sm:$0xff]
        %v243 = vld [vmem:[%s187 + $0x88] sm:$0xff]
        %v244 = vld [vmem:[%s187 + $0x90] sm:$0xff]
        %v245 = vld [vmem:[%s187 + $0x98] sm:$0xff]
        %v246 = vld [vmem:[%s187 + $0xa0] sm:$0xff]
        %v247 = vld [vmem:[%s187 + $0xa8] sm:$0xff]
        %v248 = vld [vmem:[%s187 + $0xb0] sm:$0xff]
        %v249 = vld [vmem:[%s187 + $0xb8] sm:$0xff]
        %v250 = vld [vmem:[%s187 + $0xc0] sm:$0xff]
        %v251 = vld [vmem:[%s187 + $0xc8] sm:$0xff]
        %v252 = vld [vmem:[%s187 + $0xd0] sm:$0xff]
        %v253 = vld [vmem:[%s187 + $0xd8] sm:$0xff]
        %v254 = vld [vmem:[%s187 + $0xe0] sm:$0xff]
        %v255 = vld [vmem:[%s187 + $0xe8] sm:$0xff]
        %v256 = vld [vmem:[%s187 + $0xf0] sm:$0xff]
        %v257 = vld [vmem:[%s187 + $0xf8] sm:$0xff]
        %v258 = vld [vmem:[#allocation7] sm:$0xff]
        %v259 = vld [vmem:[#allocation7 + $0x8] sm:$0xff]
        %v260 = vld [vmem:[#allocation7 + $0x10] sm:$0xff]
        %v261 = vld [vmem:[#allocation7 + $0x18] sm:$0xff]
        %v262 = vld [vmem:[#allocation7 + $0x20] sm:$0xff]
        %v263 = vld [vmem:[#allocation7 + $0x28] sm:$0xff]
        %v264 = vld [vmem:[#allocation7 + $0x30] sm:$0xff]
        %v265 = vld [vmem:[#allocation7 + $0x38] sm:$0xff]
        %v266 = vld [vmem:[#allocation7 + $0x40] sm:$0xff]
        %v267 = vld [vmem:[#allocation7 + $0x48] sm:$0xff]
        %v268 = vld [vmem:[#allocation7 + $0x50] sm:$0xff]
        %v269 = vld [vmem:[#allocation7 + $0x58] sm:$0xff]
        %v270 = vld [vmem:[#allocation7 + $0x60] sm:$0xff]
        %v271 = vld [vmem:[#allocation7 + $0x68] sm:$0xff]
        %v272 = vld [vmem:[#allocation7 + $0x70] sm:$0xff]
        %v273 = vld [vmem:[#allocation7 + $0x78] sm:$0xff]
        %v274 = vld [vmem:[#allocation7 + $0x80] sm:$0xff]
        %v275 = vld [vmem:[#allocation7 + $0x88] sm:$0xff]
        %v276 = vld [vmem:[#allocation7 + $0x90] sm:$0xff]
        %v277 = vld [vmem:[#allocation7 + $0x98] sm:$0xff]
        %v278 = vld [vmem:[#allocation7 + $0xa0] sm:$0xff]
        %v279 = vld [vmem:[#allocation7 + $0xa8] sm:$0xff]
        %v280 = vld [vmem:[#allocation7 + $0xb0] sm:$0xff]
        %v281 = vld [vmem:[#allocation7 + $0xb8] sm:$0xff]
        %v282 = vld [vmem:[#allocation7 + $0xc0] sm:$0xff]
        %v283 = vld [vmem:[#allocation7 + $0xc8] sm:$0xff]
        %v284 = vld [vmem:[#allocation7 + $0xd0] sm:$0xff]
        %v285 = vld [vmem:[#allocation7 + $0xd8] sm:$0xff]
        %v286 = vld [vmem:[#allocation7 + $0xe0] sm:$0xff]
        %v287 = vld [vmem:[#allocation7 + $0xe8] sm:$0xff]
        %v288 = vld [vmem:[#allocation7 + $0xf0] sm:$0xff]
        %v289 = vld [vmem:[#allocation7 + $0xf8] sm:$0xff]
        %v290 = vld [vmem:[#allocation7 + $0x100] sm:$0xff]
        %v291 = vld [vmem:[#allocation7 + $0x108] sm:$0xff]
        %v292 = vld [vmem:[#allocation7 + $0x110] sm:$0xff]
        %v293 = vld [vmem:[#allocation7 + $0x118] sm:$0xff]
        %v294 = vld [vmem:[#allocation7 + $0x120] sm:$0xff]
        %v295 = vld [vmem:[#allocation7 + $0x128] sm:$0xff]
        %v296 = vld [vmem:[#allocation7 + $0x130] sm:$0xff]
        %v297 = vld [vmem:[#allocation7 + $0x138] sm:$0xff]
        %v298 = vld [vmem:[#allocation7 + $0x140] sm:$0xff]
        %v299 = vld [vmem:[#allocation7 + $0x148] sm:$0xff]
        %v300 = vld [vmem:[#allocation7 + $0x150] sm:$0xff]
        %v301 = vld [vmem:[#allocation7 + $0x158] sm:$0xff]
        %v302 = vld [vmem:[#allocation7 + $0x160] sm:$0xff]
        %v303 = vld [vmem:[#allocation7 + $0x168] sm:$0xff]
        %v304 = vld [vmem:[#allocation7 + $0x170] sm:$0xff]
        %v305 = vld [vmem:[#allocation7 + $0x178] sm:$0xff]
        %v306 = vld [vmem:[#allocation7 + $0x180] sm:$0xff]
        %v307 = vld [vmem:[#allocation7 + $0x188] sm:$0xff]
        %v308 = vld [vmem:[#allocation7 + $0x190] sm:$0xff]
        %v309 = vld [vmem:[#allocation7 + $0x198] sm:$0xff]
        %v310 = vld [vmem:[#allocation7 + $0x1a0] sm:$0xff]
        %v311 = vld [vmem:[#allocation7 + $0x1a8] sm:$0xff]
        %v312 = vld [vmem:[#allocation7 + $0x1b0] sm:$0xff]
        %v313 = vld [vmem:[#allocation7 + $0x1b8] sm:$0xff]
        %v314 = vld [vmem:[#allocation7 + $0x1c0] sm:$0xff]
        %v315 = vld [vmem:[#allocation7 + $0x1c8] sm:$0xff]
        %v316 = vld [vmem:[#allocation7 + $0x1d0] sm:$0xff]
        %v317 = vld [vmem:[#allocation7 + $0x1d8] sm:$0xff]
        %v318 = vld [vmem:[#allocation7 + $0x1e0] sm:$0xff]
        %v319 = vld [vmem:[#allocation7 + $0x1e8] sm:$0xff]
        %v320 = vld [vmem:[#allocation7 + $0x1f0] sm:$0xff]
        %v321 = vld [vmem:[#allocation7 + $0x1f8] sm:$0xff]
        %v322 = vld [vmem:[%s3] sm:$0x3]
        %v324 = vlaneseq
        %v325 = vshrl.u32 %v324, 7
        %v326 = vsub.s32 0, %v325
        %v327 = vrot.slane %v322, %v326
        %v328 = vlaneseq
        %v329 = vshrl.u32 %v328, 7
        %v330 = vsub.s32 1, %v329
        %v331 = vrot.slane %v322, %v330
        %v366 = vunpack.c.l.b16 %v226
        %v367 = vunpack.c.h.b16 %v226
        %v368 = vunpack.c.l.b16 %v227
        %v369 = vunpack.c.h.b16 %v227
        %v370 = vunpack.c.l.b16 %v228
        %v371 = vunpack.c.h.b16 %v228
        %v372 = vunpack.c.l.b16 %v229
        %v373 = vunpack.c.h.b16 %v229
        %v374 = vunpack.c.l.b16 %v230
        %v375 = vunpack.c.h.b16 %v230
        %v376 = vunpack.c.l.b16 %v231
        %v377 = vunpack.c.h.b16 %v231
        %v378 = vunpack.c.l.b16 %v232
        %v379 = vunpack.c.h.b16 %v232
        %v380 = vunpack.c.l.b16 %v233
        %v381 = vunpack.c.h.b16 %v233
        %v382 = vunpack.c.l.b16 %v234
        %v383 = vunpack.c.h.b16 %v234
        %v384 = vunpack.c.l.b16 %v235
        %v385 = vunpack.c.h.b16 %v235
        %v386 = vunpack.c.l.b16 %v236
        %v387 = vunpack.c.h.b16 %v236
        %v388 = vunpack.c.l.b16 %v237
        %v389 = vunpack.c.h.b16 %v237
        %v390 = vunpack.c.l.b16 %v238
        %v391 = vunpack.c.h.b16 %v238
        %v392 = vunpack.c.l.b16 %v239
        %v393 = vunpack.c.h.b16 %v239
        %v394 = vunpack.c.l.b16 %v240
        %v395 = vunpack.c.h.b16 %v240
        %v396 = vunpack.c.l.b16 %v241
        %v397 = vunpack.c.h.b16 %v241
        %v398 = vunpack.c.l.b16 %v242
        %v399 = vunpack.c.h.b16 %v242
        %v400 = vunpack.c.l.b16 %v243
        %v401 = vunpack.c.h.b16 %v243
        %v402 = vunpack.c.l.b16 %v244
        %v403 = vunpack.c.h.b16 %v244
        %v404 = vunpack.c.l.b16 %v245
        %v405 = vunpack.c.h.b16 %v245
        %v406 = vunpack.c.l.b16 %v246
        %v407 = vunpack.c.h.b16 %v246
        %v408 = vunpack.c.l.b16 %v247
        %v409 = vunpack.c.h.b16 %v247
        %v410 = vunpack.c.l.b16 %v248
        %v411 = vunpack.c.h.b16 %v248
        %v412 = vunpack.c.l.b16 %v249
        %v413 = vunpack.c.h.b16 %v249
        %v414 = vunpack.c.l.b16 %v250
        %v415 = vunpack.c.h.b16 %v250
        %v416 = vunpack.c.l.b16 %v251
        %v417 = vunpack.c.h.b16 %v251
        %v418 = vunpack.c.l.b16 %v252
        %v419 = vunpack.c.h.b16 %v252
        %v420 = vunpack.c.l.b16 %v253
        %v421 = vunpack.c.h.b16 %v253
        %v422 = vunpack.c.l.b16 %v254
        %v423 = vunpack.c.h.b16 %v254
        %v424 = vunpack.c.l.b16 %v255
        %v425 = vunpack.c.h.b16 %v255
        %v426 = vunpack.c.l.b16 %v256
        %v427 = vunpack.c.h.b16 %v256
        %v428 = vunpack.c.l.b16 %v257
        %v429 = vunpack.c.h.b16 %v257
        %v430 = vpack.c.b16 %v370, %v366
        %v431 = vpack.c.b16 %v371, %v367
        %v432 = vpack.c.b16 %v372, %v368
        %v433 = vpack.c.b16 %v373, %v369
        %v434 = vpack.c.b16 %v378, %v374
        %v435 = vpack.c.b16 %v379, %v375
        %v436 = vpack.c.b16 %v380, %v376
        %v437 = vpack.c.b16 %v381, %v377
        %v438 = vpack.c.b16 %v386, %v382
        %v439 = vpack.c.b16 %v387, %v383
        %v440 = vpack.c.b16 %v388, %v384
        %v441 = vpack.c.b16 %v389, %v385
        %v442 = vpack.c.b16 %v394, %v390
        %v443 = vpack.c.b16 %v395, %v391
        %v444 = vpack.c.b16 %v396, %v392
        %v445 = vpack.c.b16 %v397, %v393
        %v446 = vpack.c.b16 %v402, %v398
        %v447 = vpack.c.b16 %v403, %v399
        %v448 = vpack.c.b16 %v404, %v400
        %v449 = vpack.c.b16 %v405, %v401
        %v450 = vpack.c.b16 %v410, %v406
        %v451 = vpack.c.b16 %v411, %v407
        %v452 = vpack.c.b16 %v412, %v408
        %v453 = vpack.c.b16 %v413, %v409
        %v454 = vpack.c.b16 %v418, %v414
        %v455 = vpack.c.b16 %v419, %v415
        %v456 = vpack.c.b16 %v420, %v416
        %v457 = vpack.c.b16 %v421, %v417
        %v458 = vpack.c.b16 %v426, %v422
        %v459 = vpack.c.b16 %v427, %v423
        %v460 = vpack.c.b16 %v428, %v424
        %v461 = vpack.c.b16 %v429, %v425
        %v558 = vunpack.c.l.b16 %v258
        %v559 = vunpack.c.h.b16 %v258
        %v560 = vunpack.c.l.b16 %v259
        %v561 = vunpack.c.h.b16 %v259
        %v562 = vunpack.c.l.b16 %v260
        %v563 = vunpack.c.h.b16 %v260
        %v564 = vunpack.c.l.b16 %v261
        %v565 = vunpack.c.h.b16 %v261
        %v566 = vunpack.c.l.b16 %v262
        %v567 = vunpack.c.h.b16 %v262
        %v568 = vunpack.c.l.b16 %v263
        %v569 = vunpack.c.h.b16 %v263
        %v570 = vunpack.c.l.b16 %v264
        %v571 = vunpack.c.h.b16 %v264
        %v572 = vunpack.c.l.b16 %v265
        %v573 = vunpack.c.h.b16 %v265
        %v574 = vunpack.c.l.b16 %v266
        %v575 = vunpack.c.h.b16 %v266
        %v576 = vunpack.c.l.b16 %v267
        %v577 = vunpack.c.h.b16 %v267
        %v578 = vunpack.c.l.b16 %v268
        %v579 = vunpack.c.h.b16 %v268
        %v580 = vunpack.c.l.b16 %v269
        %v581 = vunpack.c.h.b16 %v269
        %v582 = vunpack.c.l.b16 %v270
        %v583 = vunpack.c.h.b16 %v270
        %v584 = vunpack.c.l.b16 %v271
        %v585 = vunpack.c.h.b16 %v271
        %v586 = vunpack.c.l.b16 %v272
        %v587 = vunpack.c.h.b16 %v272
        %v588 = vunpack.c.l.b16 %v273
        %v589 = vunpack.c.h.b16 %v273
        %v590 = vunpack.c.l.b16 %v274
        %v591 = vunpack.c.h.b16 %v274
        %v592 = vunpack.c.l.b16 %v275
        %v593 = vunpack.c.h.b16 %v275
        %v594 = vunpack.c.l.b16 %v276
        %v595 = vunpack.c.h.b16 %v276
        %v596 = vunpack.c.l.b16 %v277
        %v597 = vunpack.c.h.b16 %v277
        %v598 = vunpack.c.l.b16 %v278
        %v599 = vunpack.c.h.b16 %v278
        %v600 = vunpack.c.l.b16 %v279
        %v601 = vunpack.c.h.b16 %v279
        %v602 = vunpack.c.l.b16 %v280
        %v603 = vunpack.c.h.b16 %v280
        %v604 = vunpack.c.l.b16 %v281
        %v605 = vunpack.c.h.b16 %v281
        %v606 = vunpack.c.l.b16 %v282
        %v607 = vunpack.c.h.b16 %v282
        %v608 = vunpack.c.l.b16 %v283
        %v609 = vunpack.c.h.b16 %v283
        %v610 = vunpack.c.l.b16 %v284
        %v611 = vunpack.c.h.b16 %v284
        %v612 = vunpack.c.l.b16 %v285
        %v613 = vunpack.c.h.b16 %v285
        %v614 = vunpack.c.l.b16 %v286
        %v615 = vunpack.c.h.b16 %v286
        %v616 = vunpack.c.l.b16 %v287
        %v617 = vunpack.c.h.b16 %v287
        %v618 = vunpack.c.l.b16 %v288
        %v619 = vunpack.c.h.b16 %v288
        %v620 = vunpack.c.l.b16 %v289
        %v621 = vunpack.c.h.b16 %v289
        %v622 = vunpack.c.l.b16 %v290
        %v623 = vunpack.c.h.b16 %v290
        %v624 = vunpack.c.l.b16 %v291
        %v625 = vunpack.c.h.b16 %v291
        %v626 = vunpack.c.l.b16 %v292
        %v627 = vunpack.c.h.b16 %v292
        %v628 = vunpack.c.l.b16 %v293
        %v629 = vunpack.c.h.b16 %v293
        %v630 = vunpack.c.l.b16 %v294
        %v631 = vunpack.c.h.b16 %v294
        %v632 = vunpack.c.l.b16 %v295
        %v633 = vunpack.c.h.b16 %v295
        %v634 = vunpack.c.l.b16 %v296
        %v635 = vunpack.c.h.b16 %v296
        %v636 = vunpack.c.l.b16 %v297
        %v637 = vunpack.c.h.b16 %v297
        %v638 = vunpack.c.l.b16 %v298
        %v639 = vunpack.c.h.b16 %v298
        %v640 = vunpack.c.l.b16 %v299
        %v641 = vunpack.c.h.b16 %v299
        %v642 = vunpack.c.l.b16 %v300
        %v643 = vunpack.c.h.b16 %v300
        %v644 = vunpack.c.l.b16 %v301
        %v645 = vunpack.c.h.b16 %v301
        %v646 = vunpack.c.l.b16 %v302
        %v647 = vunpack.c.h.b16 %v302
        %v648 = vunpack.c.l.b16 %v303
        %v649 = vunpack.c.h.b16 %v303
        %v650 = vunpack.c.l.b16 %v304
        %v651 = vunpack.c.h.b16 %v304
        %v652 = vunpack.c.l.b16 %v305
        %v653 = vunpack.c.h.b16 %v305
        %v654 = vunpack.c.l.b16 %v306
        %v655 = vunpack.c.h.b16 %v306
        %v656 = vunpack.c.l.b16 %v307
        %v657 = vunpack.c.h.b16 %v307
        %v658 = vunpack.c.l.b16 %v308
        %v659 = vunpack.c.h.b16 %v308
        %v660 = vunpack.c.l.b16 %v309
        %v661 = vunpack.c.h.b16 %v309
        %v662 = vunpack.c.l.b16 %v310
        %v663 = vunpack.c.h.b16 %v310
        %v664 = vunpack.c.l.b16 %v311
        %v665 = vunpack.c.h.b16 %v311
        %v666 = vunpack.c.l.b16 %v312
        %v667 = vunpack.c.h.b16 %v312
        %v668 = vunpack.c.l.b16 %v313
        %v669 = vunpack.c.h.b16 %v313
        %v670 = vunpack.c.l.b16 %v314
        %v671 = vunpack.c.h.b16 %v314
        %v672 = vunpack.c.l.b16 %v315
        %v673 = vunpack.c.h.b16 %v315
        %v674 = vunpack.c.l.b16 %v316
        %v675 = vunpack.c.h.b16 %v316
        %v676 = vunpack.c.l.b16 %v317
        %v677 = vunpack.c.h.b16 %v317
        %v678 = vunpack.c.l.b16 %v318
        %v679 = vunpack.c.h.b16 %v318
        %v680 = vunpack.c.l.b16 %v319
        %v681 = vunpack.c.h.b16 %v319
        %v682 = vunpack.c.l.b16 %v320
        %v683 = vunpack.c.h.b16 %v320
        %v684 = vunpack.c.l.b16 %v321
        %v685 = vunpack.c.h.b16 %v321
        %v686 = vpack.c.b16 %v560, %v558
        %v687 = vpack.c.b16 %v561, %v559
        %v688 = vpack.c.b16 %v564, %v562
        %v689 = vpack.c.b16 %v565, %v563
        %v690 = vpack.c.b16 %v568, %v566
        %v691 = vpack.c.b16 %v569, %v567
        %v692 = vpack.c.b16 %v572, %v570
        %v693 = vpack.c.b16 %v573, %v571
        %v694 = vpack.c.b16 %v576, %v574
        %v695 = vpack.c.b16 %v577, %v575
        %v696 = vpack.c.b16 %v580, %v578
        %v697 = vpack.c.b16 %v581, %v579
        %v698 = vpack.c.b16 %v584, %v582
        %v699 = vpack.c.b16 %v585, %v583
        %v700 = vpack.c.b16 %v588, %v586
        %v701 = vpack.c.b16 %v589, %v587
        %v702 = vpack.c.b16 %v592, %v590
        %v703 = vpack.c.b16 %v593, %v591
        %v704 = vpack.c.b16 %v596, %v594
        %v705 = vpack.c.b16 %v597, %v595
        %v706 = vpack.c.b16 %v600, %v598
        %v707 = vpack.c.b16 %v601, %v599
        %v708 = vpack.c.b16 %v604, %v602
        %v709 = vpack.c.b16 %v605, %v603
        %v710 = vpack.c.b16 %v608, %v606
        %v711 = vpack.c.b16 %v609, %v607
        %v712 = vpack.c.b16 %v612, %v610
        %v713 = vpack.c.b16 %v613, %v611
        %v714 = vpack.c.b16 %v616, %v614
        %v715 = vpack.c.b16 %v617, %v615
        %v716 = vpack.c.b16 %v620, %v618
        %v717 = vpack.c.b16 %v621, %v619
        %v718 = vpack.c.b16 %v624, %v622
        %v719 = vpack.c.b16 %v625, %v623
        %v720 = vpack.c.b16 %v628, %v626
        %v721 = vpack.c.b16 %v629, %v627
        %v722 = vpack.c.b16 %v632, %v630
        %v723 = vpack.c.b16 %v633, %v631
        %v724 = vpack.c.b16 %v636, %v634
        %v725 = vpack.c.b16 %v637, %v635
        %v726 = vpack.c.b16 %v640, %v638
        %v727 = vpack.c.b16 %v641, %v639
        %v728 = vpack.c.b16 %v644, %v642
        %v729 = vpack.c.b16 %v645, %v643
        %v730 = vpack.c.b16 %v648, %v646
        %v731 = vpack.c.b16 %v649, %v647
        %v732 = vpack.c.b16 %v652, %v650
        %v733 = vpack.c.b16 %v653, %v651
        %v734 = vpack.c.b16 %v656, %v654
        %v735 = vpack.c.b16 %v657, %v655
        %v736 = vpack.c.b16 %v660, %v658
        %v737 = vpack.c.b16 %v661, %v659
        %v738 = vpack.c.b16 %v664, %v662
        %v739 = vpack.c.b16 %v665, %v663
        %v740 = vpack.c.b16 %v668, %v666
        %v741 = vpack.c.b16 %v669, %v667
        %v742 = vpack.c.b16 %v672, %v670
        %v743 = vpack.c.b16 %v673, %v671
        %v744 = vpack.c.b16 %v676, %v674
        %v745 = vpack.c.b16 %v677, %v675
        %v746 = vpack.c.b16 %v680, %v678
        %v747 = vpack.c.b16 %v681, %v679
        %v748 = vpack.c.b16 %v684, %v682
        %v749 = vpack.c.b16 %v685, %v683
        %814 = vmatprep.subr.bf16.mxu0 %v687
        %815 = vmatpush1.bf16.msra.mxu0 %v686
        %816 = vmatprep.subr.bf16.mxu0 %v689
        %817 = vmatpush1.bf16.msra.mxu0 %v688
        %818 = vmatprep.subr.bf16.mxu0 %v691
        %819 = vmatpush1.bf16.msra.mxu0 %v690
        %820 = vmatprep.subr.bf16.mxu0 %v693
        %821 = vmatpush1.bf16.msra.mxu0 %v692
        %822 = vmatprep.subr.bf16.mxu0 %v695
        %823 = vmatpush1.bf16.msra.mxu0 %v694
        %824 = vmatprep.subr.bf16.mxu0 %v697
        %825 = vmatpush1.bf16.msra.mxu0 %v696
        %826 = vmatprep.subr.bf16.mxu0 %v699
        %827 = vmatpush1.bf16.msra.mxu0 %v698
        %828 = vmatprep.subr.bf16.mxu0 %v701
        %829 = vmatpush1.bf16.msra.mxu0 %v700
        %830 = vmatprep.subr.bf16.mxu0 %v703
        %831 = vmatpush1.bf16.msra.mxu0 %v702
        %832 = vmatprep.subr.bf16.mxu0 %v705
        %833 = vmatpush1.bf16.msra.mxu0 %v704
        %834 = vmatprep.subr.bf16.mxu0 %v707
        %835 = vmatpush1.bf16.msra.mxu0 %v706
        %836 = vmatprep.subr.bf16.mxu0 %v709
        %837 = vmatpush1.bf16.msra.mxu0 %v708
        %838 = vmatprep.subr.bf16.mxu0 %v711
        %839 = vmatpush1.bf16.msra.mxu0 %v710
        %840 = vmatprep.subr.bf16.mxu0 %v713
        %841 = vmatpush1.bf16.msra.mxu0 %v712
        %842 = vmatprep.subr.bf16.mxu0 %v715
        %843 = vmatpush1.bf16.msra.mxu0 %v714
        %844 = vmatprep.subr.bf16.mxu0 %v717
        %845 = vmatpush1.bf16.msra.mxu0 %v716
        %846 = vmatprep.mubr.bf16.mxu0 %v431
        %847 = vmatmul.mubr.bf16.gmra.mrb[0].mxu0 %v430
        %v848 = vpop.f32.mrb[0].mxu0
        %v849 = vadd.f32 %v327, %v848
        %v850 = vpop.f32.mrb[0].mxu0
        %v851 = vadd.f32 %v331, %v850
        %v852 = vpop.f32.mrb[0].mxu0
        %v853 = vadd.f32 %v327, %v852
        %v854 = vpop.f32.mrb[0].mxu0
        %v855 = vadd.f32 %v331, %v854
        %856 = vmatprep.mubr.bf16.mxu0 %v435
        %857 = vmatmul.mubr.bf16.gmra.mrb[0].mxu0 %v434
        %v858 = vpop.f32.mrb[0].mxu0
        %v859 = vadd.f32 %v327, %v858
        %v860 = vpop.f32.mrb[0].mxu0
        %v861 = vadd.f32 %v331, %v860
        %v862 = vpop.f32.mrb[0].mxu0
        %v863 = vadd.f32 %v327, %v862
        %v864 = vpop.f32.mrb[0].mxu0
        %v865 = vadd.f32 %v331, %v864
        %866 = vmatprep.mubr.bf16.mxu0 %v439
        %867 = vmatmul.mubr.bf16.gmra.mrb[0].mxu0 %v438
        %v868 = vpop.f32.mrb[0].mxu0
        %v869 = vadd.f32 %v327, %v868
        %v870 = vpop.f32.mrb[0].mxu0
        %v871 = vadd.f32 %v331, %v870
        %v872 = vpop.f32.mrb[0].mxu0
        %v873 = vadd.f32 %v327, %v872
        %v874 = vpop.f32.mrb[0].mxu0
        %v875 = vadd.f32 %v331, %v874
        %876 = vmatprep.mubr.bf16.mxu0 %v443
        %877 = vmatmul.mubr.bf16.gmra.mrb[0].mxu0 %v442
        %v878 = vpop.f32.mrb[0].mxu0
        %v879 = vadd.f32 %v327, %v878
        %v880 = vpop.f32.mrb[0].mxu0
        %v881 = vadd.f32 %v331, %v880
        %v882 = vpop.f32.mrb[0].mxu0
        %v883 = vadd.f32 %v327, %v882
        %v884 = vpop.f32.mrb[0].mxu0
        %v885 = vadd.f32 %v331, %v884
        %886 = vmatprep.mubr.bf16.mxu0 %v447
        %887 = vmatmul.mubr.bf16.gmra.mrb[0].mxu0 %v446
        %v888 = vpop.f32.mrb[0].mxu0
        %v889 = vadd.f32 %v327, %v888
        %v890 = vpop.f32.mrb[0].mxu0
        %v891 = vadd.f32 %v331, %v890
        %v892 = vpop.f32.mrb[0].mxu0
        %v893 = vadd.f32 %v327, %v892
        %v894 = vpop.f32.mrb[0].mxu0
        %v895 = vadd.f32 %v331, %v894
        %896 = vmatprep.mubr.bf16.mxu0 %v451
        %897 = vmatmul.mubr.bf16.gmra.mrb[0].mxu0 %v450
        %v898 = vpop.f32.mrb[0].mxu0
        %v899 = vadd.f32 %v327, %v898
        %v900 = vpop.f32.mrb[0].mxu0
        %v901 = vadd.f32 %v331, %v900
        %v902 = vpop.f32.mrb[0].mxu0
        %v903 = vadd.f32 %v327, %v902
        %v904 = vpop.f32.mrb[0].mxu0
        %v905 = vadd.f32 %v331, %v904
        %906 = vmatprep.mubr.bf16.mxu0 %v455
        %907 = vmatmul.mubr.bf16.gmra.mrb[0].mxu0 %v454
        %v908 = vpop.f32.mrb[0].mxu0
        %v909 = vadd.f32 %v327, %v908
        %v910 = vpop.f32.mrb[0].mxu0
        %v911 = vadd.f32 %v331, %v910
        %v912 = vpop.f32.mrb[0].mxu0
        %v913 = vadd.f32 %v327, %v912
        %v914 = vpop.f32.mrb[0].mxu0
        %v915 = vadd.f32 %v331, %v914
        %916 = vmatprep.mubr.bf16.mxu0 %v459
        %917 = vmatmul.mubr.bf16.gmra.mrb[0].mxu0 %v458
        %v918 = vpop.f32.mrb[0].mxu0
        %v919 = vadd.f32 %v327, %v918
        %v920 = vpop.f32.mrb[0].mxu0
        %v921 = vadd.f32 %v331, %v920
        %v922 = vpop.f32.mrb[0].mxu0
        %v923 = vadd.f32 %v327, %v922
        %v924 = vpop.f32.mrb[0].mxu0
        %v925 = vadd.f32 %v331, %v924
        %926 = vdwg.mxu0
        %927 = vmatprep.subr.bf16.mxu0 %v719
        %928 = vmatpush1.bf16.msra.mxu0 %v718
        %929 = vmatprep.subr.bf16.mxu0 %v721
        %930 = vmatpush1.bf16.msra.mxu0 %v720
        %931 = vmatprep.subr.bf16.mxu0 %v723
        %932 = vmatpush1.bf16.msra.mxu0 %v722
        %933 = vmatprep.subr.bf16.mxu0 %v725
        %934 = vmatpush1.bf16.msra.mxu0 %v724
        %935 = vmatprep.subr.bf16.mxu0 %v727
        %936 = vmatpush1.bf16.msra.mxu0 %v726
        %937 = vmatprep.subr.bf16.mxu0 %v729
        %938 = vmatpush1.bf16.msra.mxu0 %v728
        %939 = vmatprep.subr.bf16.mxu0 %v731
        %940 = vmatpush1.bf16.msra.mxu0 %v730
        %941 = vmatprep.subr.bf16.mxu0 %v733
        %942 = vmatpush1.bf16.msra.mxu0 %v732
        %943 = vmatprep.subr.bf16.mxu0 %v735
        %944 = vmatpush1.bf16.msra.mxu0 %v734
        %945 = vmatprep.subr.bf16.mxu0 %v737
        %946 = vmatpush1.bf16.msra.mxu0 %v736
        %947 = vmatprep.subr.bf16.mxu0 %v739
        %948 = vmatpush1.bf16.msra.mxu0 %v738
        %949 = vmatprep.subr.bf16.mxu0 %v741
        %950 = vmatpush1.bf16.msra.mxu0 %v740
        %951 = vmatprep.subr.bf16.mxu0 %v743
        %952 = vmatpush1.bf16.msra.mxu0 %v742
        %953 = vmatprep.subr.bf16.mxu0 %v745
        %954 = vmatpush1.bf16.msra.mxu0 %v744
        %955 = vmatprep.subr.bf16.mxu0 %v747
        %956 = vmatpush1.bf16.msra.mxu0 %v746
        %957 = vmatprep.subr.bf16.mxu0 %v749
        %958 = vmatpush1.bf16.msra.mxu0 %v748
        %959 = vmatprep.mubr.bf16.mxu0 %v433
        %960 = vmatmul.mubr.bf16.gmra.mrb[0].mxu0 %v432
        %v961 = vpop.f32.mrb[0].mxu0
        %v962 = vadd.f32 %v849, %v961
        %v963 = vpop.f32.mrb[0].mxu0
        %v964 = vadd.f32 %v851, %v963
        %v965 = vpop.f32.mrb[0].mxu0
        %v966 = vadd.f32 %v853, %v965
        %v967 = vpop.f32.mrb[0].mxu0
        %v968 = vadd.f32 %v855, %v967
        %969 = vmatprep.mubr.bf16.mxu0 %v437
        %970 = vmatmul.mubr.bf16.gmra.mrb[0].mxu0 %v436
        %v971 = vpop.f32.mrb[0].mxu0
        %v972 = vadd.f32 %v859, %v971
        %v973 = vpop.f32.mrb[0].mxu0
        %v974 = vadd.f32 %v861, %v973
        %v975 = vpop.f32.mrb[0].mxu0
        %v976 = vadd.f32 %v863, %v975
        %v977 = vpop.f32.mrb[0].mxu0
        %v978 = vadd.f32 %v865, %v977
        %979 = vmatprep.mubr.bf16.mxu0 %v441
        %980 = vmatmul.mubr.bf16.gmra.mrb[0].mxu0 %v440
        %v981 = vpop.f32.mrb[0].mxu0
        %v982 = vadd.f32 %v869, %v981
        %v983 = vpop.f32.mrb[0].mxu0
        %v984 = vadd.f32 %v871, %v983
        %v985 = vpop.f32.mrb[0].mxu0
        %v986 = vadd.f32 %v873, %v985
        %v987 = vpop.f32.mrb[0].mxu0
        %v988 = vadd.f32 %v875, %v987
        %989 = vmatprep.mubr.bf16.mxu0 %v445
        %990 = vmatmul.mubr.bf16.gmra.mrb[0].mxu0 %v444
        %v991 = vpop.f32.mrb[0].mxu0
        %v992 = vadd.f32 %v879, %v991
        %v993 = vpop.f32.mrb[0].mxu0
        %v994 = vadd.f32 %v881, %v993
        %v995 = vpop.f32.mrb[0].mxu0
        %v996 = vadd.f32 %v883, %v995
        %v997 = vpop.f32.mrb[0].mxu0
        %v998 = vadd.f32 %v885, %v997
        %999 = vmatprep.mubr.bf16.mxu0 %v449
        %1000 = vmatmul.mubr.bf16.gmra.mrb[0].mxu0 %v448
        %v1001 = vpop.f32.mrb[0].mxu0
        %v1002 = vadd.f32 %v889, %v1001
        %v1003 = vpop.f32.mrb[0].mxu0
        %v1004 = vadd.f32 %v891, %v1003
        %v1005 = vpop.f32.mrb[0].mxu0
        %v1006 = vadd.f32 %v893, %v1005
        %v1007 = vpop.f32.mrb[0].mxu0
        %v1008 = vadd.f32 %v895, %v1007
        %1009 = vmatprep.mubr.bf16.mxu0 %v453
        %1010 = vmatmul.mubr.bf16.gmra.mrb[0].mxu0 %v452
        %v1011 = vpop.f32.mrb[0].mxu0
        %v1012 = vadd.f32 %v899, %v1011
        %v1013 = vpop.f32.mrb[0].mxu0
        %v1014 = vadd.f32 %v901, %v1013
        %v1015 = vpop.f32.mrb[0].mxu0
        %v1016 = vadd.f32 %v903, %v1015
        %v1017 = vpop.f32.mrb[0].mxu0
        %v1018 = vadd.f32 %v905, %v1017
        %1019 = vmatprep.mubr.bf16.mxu0 %v457
        %1020 = vmatmul.mubr.bf16.gmra.mrb[0].mxu0 %v456
        %v1021 = vpop.f32.mrb[0].mxu0
        %v1022 = vadd.f32 %v909, %v1021
        %v1023 = vpop.f32.mrb[0].mxu0
        %v1024 = vadd.f32 %v911, %v1023
        %v1025 = vpop.f32.mrb[0].mxu0
        %v1026 = vadd.f32 %v913, %v1025
        %v1027 = vpop.f32.mrb[0].mxu0
        %v1028 = vadd.f32 %v915, %v1027
        %1029 = vmatprep.mubr.bf16.mxu0 %v461
        %1030 = vmatmul.mubr.bf16.gmra.mrb[0].mxu0 %v460
        %v1031 = vpop.f32.mrb[0].mxu0
        %v1032 = vadd.f32 %v919, %v1031
        %v1033 = vpop.f32.mrb[0].mxu0
        %v1034 = vadd.f32 %v921, %v1033
        %v1035 = vpop.f32.mrb[0].mxu0
        %v1036 = vadd.f32 %v923, %v1035
        %v1037 = vpop.f32.mrb[0].mxu0
        %v1038 = vadd.f32 %v925, %v1037
        %1039 = vdwg.mxu0
        %vm1040 = vcmp.gt.f32.partialorder %v962, 0.0
        %vm1041 = vcmp.gt.f32.partialorder %v964, 0.0
        %vm1042 = vcmp.gt.f32.partialorder %v966, 0.0
        %vm1043 = vcmp.gt.f32.partialorder %v968, 0.0
        %vm1044 = vcmp.gt.f32.partialorder %v972, 0.0
        %vm1045 = vcmp.gt.f32.partialorder %v974, 0.0
        %vm1046 = vcmp.gt.f32.partialorder %v976, 0.0
        %vm1047 = vcmp.gt.f32.partialorder %v978, 0.0
        %vm1048 = vcmp.gt.f32.partialorder %v982, 0.0
        %vm1049 = vcmp.gt.f32.partialorder %v984, 0.0
        %vm1050 = vcmp.gt.f32.partialorder %v986, 0.0
        %vm1051 = vcmp.gt.f32.partialorder %v988, 0.0
        %vm1052 = vcmp.gt.f32.partialorder %v992, 0.0
        %vm1053 = vcmp.gt.f32.partialorder %v994, 0.0
        %vm1054 = vcmp.gt.f32.partialorder %v996, 0.0
        %vm1055 = vcmp.gt.f32.partialorder %v998, 0.0
        %vm1056 = vcmp.gt.f32.partialorder %v1002, 0.0
        %vm1057 = vcmp.gt.f32.partialorder %v1004, 0.0
        %vm1058 = vcmp.gt.f32.partialorder %v1006, 0.0
        %vm1059 = vcmp.gt.f32.partialorder %v1008, 0.0
        %vm1060 = vcmp.gt.f32.partialorder %v1012, 0.0
        %vm1061 = vcmp.gt.f32.partialorder %v1014, 0.0
        %vm1062 = vcmp.gt.f32.partialorder %v1016, 0.0
        %vm1063 = vcmp.gt.f32.partialorder %v1018, 0.0
        %vm1064 = vcmp.gt.f32.partialorder %v1022, 0.0
        %vm1065 = vcmp.gt.f32.partialorder %v1024, 0.0
        %vm1066 = vcmp.gt.f32.partialorder %v1026, 0.0
        %vm1067 = vcmp.gt.f32.partialorder %v1028, 0.0
        %vm1068 = vcmp.gt.f32.partialorder %v1032, 0.0
        %vm1069 = vcmp.gt.f32.partialorder %v1034, 0.0
        %vm1070 = vcmp.gt.f32.partialorder %v1036, 0.0
        %vm1071 = vcmp.gt.f32.partialorder %v1038, 0.0
        %v1072 = vmul.f32 %v962, 0.2
        %v1073 = vmul.f32 %v964, 0.2
        %v1074 = vmul.f32 %v966, 0.2
        %v1075 = vmul.f32 %v968, 0.2
        %v1076 = vmul.f32 %v972, 0.2
        %v1077 = vmul.f32 %v974, 0.2
        %v1078 = vmul.f32 %v976, 0.2
        %v1079 = vmul.f32 %v978, 0.2
        %v1080 = vmul.f32 %v982, 0.2
        %v1081 = vmul.f32 %v984, 0.2
        %v1082 = vmul.f32 %v986, 0.2
        %v1083 = vmul.f32 %v988, 0.2
        %v1084 = vmul.f32 %v992, 0.2
        %v1085 = vmul.f32 %v994, 0.2
        %v1086 = vmul.f32 %v996, 0.2
        %v1087 = vmul.f32 %v998, 0.2
        %v1088 = vmul.f32 %v1002, 0.2
        %v1089 = vmul.f32 %v1004, 0.2
        %v1090 = vmul.f32 %v1006, 0.2
        %v1091 = vmul.f32 %v1008, 0.2
        %v1092 = vmul.f32 %v1012, 0.2
        %v1093 = vmul.f32 %v1014, 0.2
        %v1094 = vmul.f32 %v1016, 0.2
        %v1095 = vmul.f32 %v1018, 0.2
        %v1096 = vmul.f32 %v1022, 0.2
        %v1097 = vmul.f32 %v1024, 0.2
        %v1098 = vmul.f32 %v1026, 0.2
        %v1099 = vmul.f32 %v1028, 0.2
        %v1100 = vmul.f32 %v1032, 0.2
        %v1101 = vmul.f32 %v1034, 0.2
        %v1102 = vmul.f32 %v1036, 0.2
        %v1103 = vmul.f32 %v1038, 0.2
        %v1104 = vsel %vm1040, %v962, %v1072
        %v1105 = vsel %vm1041, %v964, %v1073
        %v1106 = vsel %vm1042, %v966, %v1074
        %v1107 = vsel %vm1043, %v968, %v1075
        %v1108 = vsel %vm1044, %v972, %v1076
        %v1109 = vsel %vm1045, %v974, %v1077
        %v1110 = vsel %vm1046, %v976, %v1078
        %v1111 = vsel %vm1047, %v978, %v1079
        %v1112 = vsel %vm1048, %v982, %v1080
        %v1113 = vsel %vm1049, %v984, %v1081
        %v1114 = vsel %vm1050, %v986, %v1082
        %v1115 = vsel %vm1051, %v988, %v1083
        %v1116 = vsel %vm1052, %v992, %v1084
        %v1117 = vsel %vm1053, %v994, %v1085
        %v1118 = vsel %vm1054, %v996, %v1086
        %v1119 = vsel %vm1055, %v998, %v1087
        %v1120 = vsel %vm1056, %v1002, %v1088
        %v1121 = vsel %vm1057, %v1004, %v1089
        %v1122 = vsel %vm1058, %v1006, %v1090
        %v1123 = vsel %vm1059, %v1008, %v1091
        %v1124 = vsel %vm1060, %v1012, %v1092
        %v1125 = vsel %vm1061, %v1014, %v1093
        %v1126 = vsel %vm1062, %v1016, %v1094
        %v1127 = vsel %vm1063, %v1018, %v1095
        %v1128 = vsel %vm1064, %v1022, %v1096
        %v1129 = vsel %vm1065, %v1024, %v1097
        %v1130 = vsel %vm1066, %v1026, %v1098
        %v1131 = vsel %vm1067, %v1028, %v1099
        %v1132 = vsel %vm1068, %v1032, %v1100
        %v1133 = vsel %vm1069, %v1034, %v1101
        %v1134 = vsel %vm1070, %v1036, %v1102
        %v1135 = vsel %vm1071, %v1038, %v1103
        %v1136 = vlaneseq
        %v1137 = vshrl.u32 %v1136, 7
        %v1138 = vadd.s32 %v1137, 8
        %v1139 = vadd.s32 %v1137, 16
        %v1140 = vadd.s32 %v1137, 24
        %v1141 = vadd.s32 %v1137, 32
        %v1142 = vadd.s32 %v1137, 40
        %v1143 = vadd.s32 %v1137, 48
        %v1144 = vadd.s32 %v1137, 56
        %v1145 = vadd.s32 %v1137, 64
        %v1146 = vadd.s32 %v1137, 72
        %v1147 = vadd.s32 %v1137, 80
        %v1148 = vadd.s32 %v1137, 88
        %v1149 = vadd.s32 %v1137, 96
        %v1150 = vadd.s32 %v1137, 104
        %v1151 = vadd.s32 %v1137, 112
        %v1152 = vadd.s32 %v1137, 120
        %v1153 = vlaneseq
        %v1154 = vand.u32 %v1153, 127
        %v1155 = vadd.s32 %v1154, 128
        %s1156 = smul.u32 %s23, 128
        %v1157 = vstv %s1156
        %v1158 = vadd.s32 %v1137, %v1157
        %v1159 = vadd.s32 %v1138, %v1157
        %v1160 = vadd.s32 %v1139, %v1157
        %v1161 = vadd.s32 %v1140, %v1157
        %v1162 = vadd.s32 %v1141, %v1157
        %v1163 = vadd.s32 %v1142, %v1157
        %v1164 = vadd.s32 %v1143, %v1157
        %v1165 = vadd.s32 %v1144, %v1157
        %v1166 = vadd.s32 %v1145, %v1157
        %v1167 = vadd.s32 %v1146, %v1157
        %v1168 = vadd.s32 %v1147, %v1157
        %v1169 = vadd.s32 %v1148, %v1157
        %v1170 = vadd.s32 %v1149, %v1157
        %v1171 = vadd.s32 %v1150, %v1157
        %v1172 = vadd.s32 %v1151, %v1157
        %v1173 = vadd.s32 %v1152, %v1157
        %v1174 = vmul.u32 %v1158, 256
        %v1175 = vmul.u32 %v1159, 256
        %v1176 = vmul.u32 %v1160, 256
        %v1177 = vmul.u32 %v1161, 256
        %v1178 = vmul.u32 %v1162, 256
        %v1179 = vmul.u32 %v1163, 256
        %v1180 = vmul.u32 %v1164, 256
        %v1181 = vmul.u32 %v1165, 256
        %v1182 = vmul.u32 %v1166, 256
        %v1183 = vmul.u32 %v1167, 256
        %v1184 = vmul.u32 %v1168, 256
        %v1185 = vmul.u32 %v1169, 256
        %v1186 = vmul.u32 %v1170, 256
        %v1187 = vmul.u32 %v1171, 256
        %v1188 = vmul.u32 %v1172, 256
        %v1189 = vmul.u32 %v1173, 256
        %v1190 = vadd.s32 %v1174, %v1154
        %v1191 = vadd.s32 %v1174, %v1155
        %v1192 = vadd.s32 %v1175, %v1154
        %v1193 = vadd.s32 %v1175, %v1155
        %v1194 = vadd.s32 %v1176, %v1154
        %v1195 = vadd.s32 %v1176, %v1155
        %v1196 = vadd.s32 %v1177, %v1154
        %v1197 = vadd.s32 %v1177, %v1155
        %v1198 = vadd.s32 %v1178, %v1154
        %v1199 = vadd.s32 %v1178, %v1155
        %v1200 = vadd.s32 %v1179, %v1154
        %v1201 = vadd.s32 %v1179, %v1155
        %v1202 = vadd.s32 %v1180, %v1154
        %v1203 = vadd.s32 %v1180, %v1155
        %v1204 = vadd.s32 %v1181, %v1154
        %v1205 = vadd.s32 %v1181, %v1155
        %v1206 = vadd.s32 %v1182, %v1154
        %v1207 = vadd.s32 %v1182, %v1155
        %v1208 = vadd.s32 %v1183, %v1154
        %v1209 = vadd.s32 %v1183, %v1155
        %v1210 = vadd.s32 %v1184, %v1154
        %v1211 = vadd.s32 %v1184, %v1155
        %v1212 = vadd.s32 %v1185, %v1154
        %v1213 = vadd.s32 %v1185, %v1155
        %v1214 = vadd.s32 %v1186, %v1154
        %v1215 = vadd.s32 %v1186, %v1155
        %v1216 = vadd.s32 %v1187, %v1154
        %v1217 = vadd.s32 %v1187, %v1155
        %v1218 = vadd.s32 %v1188, %v1154
        %v1219 = vadd.s32 %v1188, %v1155
        %v1220 = vadd.s32 %v1189, %v1154
        %v1221 = vadd.s32 %v1189, %v1155
        %s1222 = sld [smem:[#allocation3]]
        %s1223 = smul.u32 %s1222, 2654435769
        %v1224 = vstv %s1223
        %v1225 = vxor.u32 %v1190, %v1224
        %v1226 = vxor.u32 %v1191, %v1224
        %v1227 = vxor.u32 %v1192, %v1224
        %v1228 = vxor.u32 %v1193, %v1224
        %v1229 = vxor.u32 %v1194, %v1224
        %v1230 = vxor.u32 %v1195, %v1224
        %v1231 = vxor.u32 %v1196, %v1224
        %v1232 = vxor.u32 %v1197, %v1224
        %v1233 = vxor.u32 %v1198, %v1224
        %v1234 = vxor.u32 %v1199, %v1224
        %v1235 = vxor.u32 %v1200, %v1224
        %v1236 = vxor.u32 %v1201, %v1224
        %v1237 = vxor.u32 %v1202, %v1224
        %v1238 = vxor.u32 %v1203, %v1224
        %v1239 = vxor.u32 %v1204, %v1224
        %v1240 = vxor.u32 %v1205, %v1224
        %v1241 = vxor.u32 %v1206, %v1224
        %v1242 = vxor.u32 %v1207, %v1224
        %v1243 = vxor.u32 %v1208, %v1224
        %v1244 = vxor.u32 %v1209, %v1224
        %v1245 = vxor.u32 %v1210, %v1224
        %v1246 = vxor.u32 %v1211, %v1224
        %v1247 = vxor.u32 %v1212, %v1224
        %v1248 = vxor.u32 %v1213, %v1224
        %v1249 = vxor.u32 %v1214, %v1224
        %v1250 = vxor.u32 %v1215, %v1224
        %v1251 = vxor.u32 %v1216, %v1224
        %v1252 = vxor.u32 %v1217, %v1224
        %v1253 = vxor.u32 %v1218, %v1224
        %v1254 = vxor.u32 %v1219, %v1224
        %v1255 = vxor.u32 %v1220, %v1224
        %v1256 = vxor.u32 %v1221, %v1224
        %v1257 = vshrl.u32 %v1225, 16
        %v1258 = vshrl.u32 %v1226, 16
        %v1259 = vshrl.u32 %v1227, 16
        %v1260 = vshrl.u32 %v1228, 16
        %v1261 = vshrl.u32 %v1229, 16
        %v1262 = vshrl.u32 %v1230, 16
        %v1263 = vshrl.u32 %v1231, 16
        %v1264 = vshrl.u32 %v1232, 16
        %v1265 = vshrl.u32 %v1233, 16
        %v1266 = vshrl.u32 %v1234, 16
        %v1267 = vshrl.u32 %v1235, 16
        %v1268 = vshrl.u32 %v1236, 16
        %v1269 = vshrl.u32 %v1237, 16
        %v1270 = vshrl.u32 %v1238, 16
        %v1271 = vshrl.u32 %v1239, 16
        %v1272 = vshrl.u32 %v1240, 16
        %v1273 = vshrl.u32 %v1241, 16
        %v1274 = vshrl.u32 %v1242, 16
        %v1275 = vshrl.u32 %v1243, 16
        %v1276 = vshrl.u32 %v1244, 16
        %v1277 = vshrl.u32 %v1245, 16
        %v1278 = vshrl.u32 %v1246, 16
        %v1279 = vshrl.u32 %v1247, 16
        %v1280 = vshrl.u32 %v1248, 16
        %v1281 = vshrl.u32 %v1249, 16
        %v1282 = vshrl.u32 %v1250, 16
        %v1283 = vshrl.u32 %v1251, 16
        %v1284 = vshrl.u32 %v1252, 16
        %v1285 = vshrl.u32 %v1253, 16
        %v1286 = vshrl.u32 %v1254, 16
        %v1287 = vshrl.u32 %v1255, 16
        %v1288 = vshrl.u32 %v1256, 16
        %v1289 = vxor.u32 %v1225, %v1257
        %v1290 = vxor.u32 %v1226, %v1258
        %v1291 = vxor.u32 %v1227, %v1259
        %v1292 = vxor.u32 %v1228, %v1260
        %v1293 = vxor.u32 %v1229, %v1261
        %v1294 = vxor.u32 %v1230, %v1262
        %v1295 = vxor.u32 %v1231, %v1263
        %v1296 = vxor.u32 %v1232, %v1264
        %v1297 = vxor.u32 %v1233, %v1265
        %v1298 = vxor.u32 %v1234, %v1266
        %v1299 = vxor.u32 %v1235, %v1267
        %v1300 = vxor.u32 %v1236, %v1268
        %v1301 = vxor.u32 %v1237, %v1269
        %v1302 = vxor.u32 %v1238, %v1270
        %v1303 = vxor.u32 %v1239, %v1271
        %v1304 = vxor.u32 %v1240, %v1272
        %v1305 = vxor.u32 %v1241, %v1273
        %v1306 = vxor.u32 %v1242, %v1274
        %v1307 = vxor.u32 %v1243, %v1275
        %v1308 = vxor.u32 %v1244, %v1276
        %v1309 = vxor.u32 %v1245, %v1277
        %v1310 = vxor.u32 %v1246, %v1278
        %v1311 = vxor.u32 %v1247, %v1279
        %v1312 = vxor.u32 %v1248, %v1280
        %v1313 = vxor.u32 %v1249, %v1281
        %v1314 = vxor.u32 %v1250, %v1282
        %v1315 = vxor.u32 %v1251, %v1283
        %v1316 = vxor.u32 %v1252, %v1284
        %v1317 = vxor.u32 %v1253, %v1285
        %v1318 = vxor.u32 %v1254, %v1286
        %v1319 = vxor.u32 %v1255, %v1287
        %v1320 = vxor.u32 %v1256, %v1288
        %v1321 = vmul.u32 %v1289, 2146121005
        %v1322 = vmul.u32 %v1290, 2146121005
        %v1323 = vmul.u32 %v1291, 2146121005
        %v1324 = vmul.u32 %v1292, 2146121005
        %v1325 = vmul.u32 %v1293, 2146121005
        %v1326 = vmul.u32 %v1294, 2146121005
        %v1327 = vmul.u32 %v1295, 2146121005
        %v1328 = vmul.u32 %v1296, 2146121005
        %v1329 = vmul.u32 %v1297, 2146121005
        %v1330 = vmul.u32 %v1298, 2146121005
        %v1331 = vmul.u32 %v1299, 2146121005
        %v1332 = vmul.u32 %v1300, 2146121005
        %v1333 = vmul.u32 %v1301, 2146121005
        %v1334 = vmul.u32 %v1302, 2146121005
        %v1335 = vmul.u32 %v1303, 2146121005
        %v1336 = vmul.u32 %v1304, 2146121005
        %v1337 = vmul.u32 %v1305, 2146121005
        %v1338 = vmul.u32 %v1306, 2146121005
        %v1339 = vmul.u32 %v1307, 2146121005
        %v1340 = vmul.u32 %v1308, 2146121005
        %v1341 = vmul.u32 %v1309, 2146121005
        %v1342 = vmul.u32 %v1310, 2146121005
        %v1343 = vmul.u32 %v1311, 2146121005
        %v1344 = vmul.u32 %v1312, 2146121005
        %v1345 = vmul.u32 %v1313, 2146121005
        %v1346 = vmul.u32 %v1314, 2146121005
        %v1347 = vmul.u32 %v1315, 2146121005
        %v1348 = vmul.u32 %v1316, 2146121005
        %v1349 = vmul.u32 %v1317, 2146121005
        %v1350 = vmul.u32 %v1318, 2146121005
        %v1351 = vmul.u32 %v1319, 2146121005
        %v1352 = vmul.u32 %v1320, 2146121005
        %v1353 = vshrl.u32 %v1321, 15
        %v1354 = vshrl.u32 %v1322, 15
        %v1355 = vshrl.u32 %v1323, 15
        %v1356 = vshrl.u32 %v1324, 15
        %v1357 = vshrl.u32 %v1325, 15
        %v1358 = vshrl.u32 %v1326, 15
        %v1359 = vshrl.u32 %v1327, 15
        %v1360 = vshrl.u32 %v1328, 15
        %v1361 = vshrl.u32 %v1329, 15
        %v1362 = vshrl.u32 %v1330, 15
        %v1363 = vshrl.u32 %v1331, 15
        %v1364 = vshrl.u32 %v1332, 15
        %v1365 = vshrl.u32 %v1333, 15
        %v1366 = vshrl.u32 %v1334, 15
        %v1367 = vshrl.u32 %v1335, 15
        %v1368 = vshrl.u32 %v1336, 15
        %v1369 = vshrl.u32 %v1337, 15
        %v1370 = vshrl.u32 %v1338, 15
        %v1371 = vshrl.u32 %v1339, 15
        %v1372 = vshrl.u32 %v1340, 15
        %v1373 = vshrl.u32 %v1341, 15
        %v1374 = vshrl.u32 %v1342, 15
        %v1375 = vshrl.u32 %v1343, 15
        %v1376 = vshrl.u32 %v1344, 15
        %v1377 = vshrl.u32 %v1345, 15
        %v1378 = vshrl.u32 %v1346, 15
        %v1379 = vshrl.u32 %v1347, 15
        %v1380 = vshrl.u32 %v1348, 15
        %v1381 = vshrl.u32 %v1349, 15
        %v1382 = vshrl.u32 %v1350, 15
        %v1383 = vshrl.u32 %v1351, 15
        %v1384 = vshrl.u32 %v1352, 15
        %v1385 = vxor.u32 %v1321, %v1353
        %v1386 = vxor.u32 %v1322, %v1354
        %v1387 = vxor.u32 %v1323, %v1355
        %v1388 = vxor.u32 %v1324, %v1356
        %v1389 = vxor.u32 %v1325, %v1357
        %v1390 = vxor.u32 %v1326, %v1358
        %v1391 = vxor.u32 %v1327, %v1359
        %v1392 = vxor.u32 %v1328, %v1360
        %v1393 = vxor.u32 %v1329, %v1361
        %v1394 = vxor.u32 %v1330, %v1362
        %v1395 = vxor.u32 %v1331, %v1363
        %v1396 = vxor.u32 %v1332, %v1364
        %v1397 = vxor.u32 %v1333, %v1365
        %v1398 = vxor.u32 %v1334, %v1366
        %v1399 = vxor.u32 %v1335, %v1367
        %v1400 = vxor.u32 %v1336, %v1368
        %v1401 = vxor.u32 %v1337, %v1369
        %v1402 = vxor.u32 %v1338, %v1370
        %v1403 = vxor.u32 %v1339, %v1371
        %v1404 = vxor.u32 %v1340, %v1372
        %v1405 = vxor.u32 %v1341, %v1373
        %v1406 = vxor.u32 %v1342, %v1374
        %v1407 = vxor.u32 %v1343, %v1375
        %v1408 = vxor.u32 %v1344, %v1376
        %v1409 = vxor.u32 %v1345, %v1377
        %v1410 = vxor.u32 %v1346, %v1378
        %v1411 = vxor.u32 %v1347, %v1379
        %v1412 = vxor.u32 %v1348, %v1380
        %v1413 = vxor.u32 %v1349, %v1381
        %v1414 = vxor.u32 %v1350, %v1382
        %v1415 = vxor.u32 %v1351, %v1383
        %v1416 = vxor.u32 %v1352, %v1384
        %v1417 = vmul.u32 %v1385, 2221713035
        %v1418 = vmul.u32 %v1386, 2221713035
        %v1419 = vmul.u32 %v1387, 2221713035
        %v1420 = vmul.u32 %v1388, 2221713035
        %v1421 = vmul.u32 %v1389, 2221713035
        %v1422 = vmul.u32 %v1390, 2221713035
        %v1423 = vmul.u32 %v1391, 2221713035
        %v1424 = vmul.u32 %v1392, 2221713035
        %v1425 = vmul.u32 %v1393, 2221713035
        %v1426 = vmul.u32 %v1394, 2221713035
        %v1427 = vmul.u32 %v1395, 2221713035
        %v1428 = vmul.u32 %v1396, 2221713035
        %v1429 = vmul.u32 %v1397, 2221713035
        %v1430 = vmul.u32 %v1398, 2221713035
        %v1431 = vmul.u32 %v1399, 2221713035
        %v1432 = vmul.u32 %v1400, 2221713035
        %v1433 = vmul.u32 %v1401, 2221713035
        %v1434 = vmul.u32 %v1402, 2221713035
        %v1435 = vmul.u32 %v1403, 2221713035
        %v1436 = vmul.u32 %v1404, 2221713035
        %v1437 = vmul.u32 %v1405, 2221713035
        %v1438 = vmul.u32 %v1406, 2221713035
        %v1439 = vmul.u32 %v1407, 2221713035
        %v1440 = vmul.u32 %v1408, 2221713035
        %v1441 = vmul.u32 %v1409, 2221713035
        %v1442 = vmul.u32 %v1410, 2221713035
        %v1443 = vmul.u32 %v1411, 2221713035
        %v1444 = vmul.u32 %v1412, 2221713035
        %v1445 = vmul.u32 %v1413, 2221713035
        %v1446 = vmul.u32 %v1414, 2221713035
        %v1447 = vmul.u32 %v1415, 2221713035
        %v1448 = vmul.u32 %v1416, 2221713035
        %v1449 = vshrl.u32 %v1417, 16
        %v1450 = vshrl.u32 %v1418, 16
        %v1451 = vshrl.u32 %v1419, 16
        %v1452 = vshrl.u32 %v1420, 16
        %v1453 = vshrl.u32 %v1421, 16
        %v1454 = vshrl.u32 %v1422, 16
        %v1455 = vshrl.u32 %v1423, 16
        %v1456 = vshrl.u32 %v1424, 16
        %v1457 = vshrl.u32 %v1425, 16
        %v1458 = vshrl.u32 %v1426, 16
        %v1459 = vshrl.u32 %v1427, 16
        %v1460 = vshrl.u32 %v1428, 16
        %v1461 = vshrl.u32 %v1429, 16
        %v1462 = vshrl.u32 %v1430, 16
        %v1463 = vshrl.u32 %v1431, 16
        %v1464 = vshrl.u32 %v1432, 16
        %v1465 = vshrl.u32 %v1433, 16
        %v1466 = vshrl.u32 %v1434, 16
        %v1467 = vshrl.u32 %v1435, 16
        %v1468 = vshrl.u32 %v1436, 16
        %v1469 = vshrl.u32 %v1437, 16
        %v1470 = vshrl.u32 %v1438, 16
        %v1471 = vshrl.u32 %v1439, 16
        %v1472 = vshrl.u32 %v1440, 16
        %v1473 = vshrl.u32 %v1441, 16
        %v1474 = vshrl.u32 %v1442, 16
        %v1475 = vshrl.u32 %v1443, 16
        %v1476 = vshrl.u32 %v1444, 16
        %v1477 = vshrl.u32 %v1445, 16
        %v1478 = vshrl.u32 %v1446, 16
        %v1479 = vshrl.u32 %v1447, 16
        %v1480 = vshrl.u32 %v1448, 16
        %v1481 = vxor.u32 %v1417, %v1449
        %v1482 = vxor.u32 %v1418, %v1450
        %v1483 = vxor.u32 %v1419, %v1451
        %v1484 = vxor.u32 %v1420, %v1452
        %v1485 = vxor.u32 %v1421, %v1453
        %v1486 = vxor.u32 %v1422, %v1454
        %v1487 = vxor.u32 %v1423, %v1455
        %v1488 = vxor.u32 %v1424, %v1456
        %v1489 = vxor.u32 %v1425, %v1457
        %v1490 = vxor.u32 %v1426, %v1458
        %v1491 = vxor.u32 %v1427, %v1459
        %v1492 = vxor.u32 %v1428, %v1460
        %v1493 = vxor.u32 %v1429, %v1461
        %v1494 = vxor.u32 %v1430, %v1462
        %v1495 = vxor.u32 %v1431, %v1463
        %v1496 = vxor.u32 %v1432, %v1464
        %v1497 = vxor.u32 %v1433, %v1465
        %v1498 = vxor.u32 %v1434, %v1466
        %v1499 = vxor.u32 %v1435, %v1467
        %v1500 = vxor.u32 %v1436, %v1468
        %v1501 = vxor.u32 %v1437, %v1469
        %v1502 = vxor.u32 %v1438, %v1470
        %v1503 = vxor.u32 %v1439, %v1471
        %v1504 = vxor.u32 %v1440, %v1472
        %v1505 = vxor.u32 %v1441, %v1473
        %v1506 = vxor.u32 %v1442, %v1474
        %v1507 = vxor.u32 %v1443, %v1475
        %v1508 = vxor.u32 %v1444, %v1476
        %v1509 = vxor.u32 %v1445, %v1477
        %v1510 = vxor.u32 %v1446, %v1478
        %v1511 = vxor.u32 %v1447, %v1479
        %v1512 = vxor.u32 %v1448, %v1480
        %v1513 = vshrl.u32 %v1481, 30
        %v1514 = vshrl.u32 %v1482, 30
        %v1515 = vshrl.u32 %v1483, 30
        %v1516 = vshrl.u32 %v1484, 30
        %v1517 = vshrl.u32 %v1485, 30
        %v1518 = vshrl.u32 %v1486, 30
        %v1519 = vshrl.u32 %v1487, 30
        %v1520 = vshrl.u32 %v1488, 30
        %v1521 = vshrl.u32 %v1489, 30
        %v1522 = vshrl.u32 %v1490, 30
        %v1523 = vshrl.u32 %v1491, 30
        %v1524 = vshrl.u32 %v1492, 30
        %v1525 = vshrl.u32 %v1493, 30
        %v1526 = vshrl.u32 %v1494, 30
        %v1527 = vshrl.u32 %v1495, 30
        %v1528 = vshrl.u32 %v1496, 30
        %v1529 = vshrl.u32 %v1497, 30
        %v1530 = vshrl.u32 %v1498, 30
        %v1531 = vshrl.u32 %v1499, 30
        %v1532 = vshrl.u32 %v1500, 30
        %v1533 = vshrl.u32 %v1501, 30
        %v1534 = vshrl.u32 %v1502, 30
        %v1535 = vshrl.u32 %v1503, 30
        %v1536 = vshrl.u32 %v1504, 30
        %v1537 = vshrl.u32 %v1505, 30
        %v1538 = vshrl.u32 %v1506, 30
        %v1539 = vshrl.u32 %v1507, 30
        %v1540 = vshrl.u32 %v1508, 30
        %v1541 = vshrl.u32 %v1509, 30
        %v1542 = vshrl.u32 %v1510, 30
        %v1543 = vshrl.u32 %v1511, 30
        %v1544 = vshrl.u32 %v1512, 30
        %v1545 = vand.u32 %v1513, 2
        %v1546 = vand.u32 %v1514, 2
        %v1547 = vand.u32 %v1515, 2
        %v1548 = vand.u32 %v1516, 2
        %v1549 = vand.u32 %v1517, 2
        %v1550 = vand.u32 %v1518, 2
        %v1551 = vand.u32 %v1519, 2
        %v1552 = vand.u32 %v1520, 2
        %v1553 = vand.u32 %v1521, 2
        %v1554 = vand.u32 %v1522, 2
        %v1555 = vand.u32 %v1523, 2
        %v1556 = vand.u32 %v1524, 2
        %v1557 = vand.u32 %v1525, 2
        %v1558 = vand.u32 %v1526, 2
        %v1559 = vand.u32 %v1527, 2
        %v1560 = vand.u32 %v1528, 2
        %v1561 = vand.u32 %v1529, 2
        %v1562 = vand.u32 %v1530, 2
        %v1563 = vand.u32 %v1531, 2
        %v1564 = vand.u32 %v1532, 2
        %v1565 = vand.u32 %v1533, 2
        %v1566 = vand.u32 %v1534, 2
        %v1567 = vand.u32 %v1535, 2
        %v1568 = vand.u32 %v1536, 2
        %v1569 = vand.u32 %v1537, 2
        %v1570 = vand.u32 %v1538, 2
        %v1571 = vand.u32 %v1539, 2
        %v1572 = vand.u32 %v1540, 2
        %v1573 = vand.u32 %v1541, 2
        %v1574 = vand.u32 %v1542, 2
        %v1575 = vand.u32 %v1543, 2
        %v1576 = vand.u32 %v1544, 2
        %v1577 = vshrl.u32 %v1545, 16
        %v1578 = vand.u32 %v1545, 65535
        %v1579 = vcvt.s32.f32 %v1577
        %v1580 = vmul.f32 %v1579, 65536.0
        %v1581 = vcvt.s32.f32 %v1578
        %v1582 = vadd.f32 %v1580, %v1581
        %v1583 = vshrl.u32 %v1546, 16
        %v1584 = vand.u32 %v1546, 65535
        %v1585 = vcvt.s32.f32 %v1583
        %v1586 = vmul.f32 %v1585, 65536.0
        %v1587 = vcvt.s32.f32 %v1584
        %v1588 = vadd.f32 %v1586, %v1587
        %v1589 = vshrl.u32 %v1547, 16
        %v1590 = vand.u32 %v1547, 65535
        %v1591 = vcvt.s32.f32 %v1589
        %v1592 = vmul.f32 %v1591, 65536.0
        %v1593 = vcvt.s32.f32 %v1590
        %v1594 = vadd.f32 %v1592, %v1593
        %v1595 = vshrl.u32 %v1548, 16
        %v1596 = vand.u32 %v1548, 65535
        %v1597 = vcvt.s32.f32 %v1595
        %v1598 = vmul.f32 %v1597, 65536.0
        %v1599 = vcvt.s32.f32 %v1596
        %v1600 = vadd.f32 %v1598, %v1599
        %v1601 = vshrl.u32 %v1549, 16
        %v1602 = vand.u32 %v1549, 65535
        %v1603 = vcvt.s32.f32 %v1601
        %v1604 = vmul.f32 %v1603, 65536.0
        %v1605 = vcvt.s32.f32 %v1602
        %v1606 = vadd.f32 %v1604, %v1605
        %v1607 = vshrl.u32 %v1550, 16
        %v1608 = vand.u32 %v1550, 65535
        %v1609 = vcvt.s32.f32 %v1607
        %v1610 = vmul.f32 %v1609, 65536.0
        %v1611 = vcvt.s32.f32 %v1608
        %v1612 = vadd.f32 %v1610, %v1611
        %v1613 = vshrl.u32 %v1551, 16
        %v1614 = vand.u32 %v1551, 65535
        %v1615 = vcvt.s32.f32 %v1613
        %v1616 = vmul.f32 %v1615, 65536.0
        %v1617 = vcvt.s32.f32 %v1614
        %v1618 = vadd.f32 %v1616, %v1617
        %v1619 = vshrl.u32 %v1552, 16
        %v1620 = vand.u32 %v1552, 65535
        %v1621 = vcvt.s32.f32 %v1619
        %v1622 = vmul.f32 %v1621, 65536.0
        %v1623 = vcvt.s32.f32 %v1620
        %v1624 = vadd.f32 %v1622, %v1623
        %v1625 = vshrl.u32 %v1553, 16
        %v1626 = vand.u32 %v1553, 65535
        %v1627 = vcvt.s32.f32 %v1625
        %v1628 = vmul.f32 %v1627, 65536.0
        %v1629 = vcvt.s32.f32 %v1626
        %v1630 = vadd.f32 %v1628, %v1629
        %v1631 = vshrl.u32 %v1554, 16
        %v1632 = vand.u32 %v1554, 65535
        %v1633 = vcvt.s32.f32 %v1631
        %v1634 = vmul.f32 %v1633, 65536.0
        %v1635 = vcvt.s32.f32 %v1632
        %v1636 = vadd.f32 %v1634, %v1635
        %v1637 = vshrl.u32 %v1555, 16
        %v1638 = vand.u32 %v1555, 65535
        %v1639 = vcvt.s32.f32 %v1637
        %v1640 = vmul.f32 %v1639, 65536.0
        %v1641 = vcvt.s32.f32 %v1638
        %v1642 = vadd.f32 %v1640, %v1641
        %v1643 = vshrl.u32 %v1556, 16
        %v1644 = vand.u32 %v1556, 65535
        %v1645 = vcvt.s32.f32 %v1643
        %v1646 = vmul.f32 %v1645, 65536.0
        %v1647 = vcvt.s32.f32 %v1644
        %v1648 = vadd.f32 %v1646, %v1647
        %v1649 = vshrl.u32 %v1557, 16
        %v1650 = vand.u32 %v1557, 65535
        %v1651 = vcvt.s32.f32 %v1649
        %v1652 = vmul.f32 %v1651, 65536.0
        %v1653 = vcvt.s32.f32 %v1650
        %v1654 = vadd.f32 %v1652, %v1653
        %v1655 = vshrl.u32 %v1558, 16
        %v1656 = vand.u32 %v1558, 65535
        %v1657 = vcvt.s32.f32 %v1655
        %v1658 = vmul.f32 %v1657, 65536.0
        %v1659 = vcvt.s32.f32 %v1656
        %v1660 = vadd.f32 %v1658, %v1659
        %v1661 = vshrl.u32 %v1559, 16
        %v1662 = vand.u32 %v1559, 65535
        %v1663 = vcvt.s32.f32 %v1661
        %v1664 = vmul.f32 %v1663, 65536.0
        %v1665 = vcvt.s32.f32 %v1662
        %v1666 = vadd.f32 %v1664, %v1665
        %v1667 = vshrl.u32 %v1560, 16
        %v1668 = vand.u32 %v1560, 65535
        %v1669 = vcvt.s32.f32 %v1667
        %v1670 = vmul.f32 %v1669, 65536.0
        %v1671 = vcvt.s32.f32 %v1668
        %v1672 = vadd.f32 %v1670, %v1671
        %v1673 = vshrl.u32 %v1561, 16
        %v1674 = vand.u32 %v1561, 65535
        %v1675 = vcvt.s32.f32 %v1673
        %v1676 = vmul.f32 %v1675, 65536.0
        %v1677 = vcvt.s32.f32 %v1674
        %v1678 = vadd.f32 %v1676, %v1677
        %v1679 = vshrl.u32 %v1562, 16
        %v1680 = vand.u32 %v1562, 65535
        %v1681 = vcvt.s32.f32 %v1679
        %v1682 = vmul.f32 %v1681, 65536.0
        %v1683 = vcvt.s32.f32 %v1680
        %v1684 = vadd.f32 %v1682, %v1683
        %v1685 = vshrl.u32 %v1563, 16
        %v1686 = vand.u32 %v1563, 65535
        %v1687 = vcvt.s32.f32 %v1685
        %v1688 = vmul.f32 %v1687, 65536.0
        %v1689 = vcvt.s32.f32 %v1686
        %v1690 = vadd.f32 %v1688, %v1689
        %v1691 = vshrl.u32 %v1564, 16
        %v1692 = vand.u32 %v1564, 65535
        %v1693 = vcvt.s32.f32 %v1691
        %v1694 = vmul.f32 %v1693, 65536.0
        %v1695 = vcvt.s32.f32 %v1692
        %v1696 = vadd.f32 %v1694, %v1695
        %v1697 = vshrl.u32 %v1565, 16
        %v1698 = vand.u32 %v1565, 65535
        %v1699 = vcvt.s32.f32 %v1697
        %v1700 = vmul.f32 %v1699, 65536.0
        %v1701 = vcvt.s32.f32 %v1698
        %v1702 = vadd.f32 %v1700, %v1701
        %v1703 = vshrl.u32 %v1566, 16
        %v1704 = vand.u32 %v1566, 65535
        %v1705 = vcvt.s32.f32 %v1703
        %v1706 = vmul.f32 %v1705, 65536.0
        %v1707 = vcvt.s32.f32 %v1704
        %v1708 = vadd.f32 %v1706, %v1707
        %v1709 = vshrl.u32 %v1567, 16
        %v1710 = vand.u32 %v1567, 65535
        %v1711 = vcvt.s32.f32 %v1709
        %v1712 = vmul.f32 %v1711, 65536.0
        %v1713 = vcvt.s32.f32 %v1710
        %v1714 = vadd.f32 %v1712, %v1713
        %v1715 = vshrl.u32 %v1568, 16
        %v1716 = vand.u32 %v1568, 65535
        %v1717 = vcvt.s32.f32 %v1715
        %v1718 = vmul.f32 %v1717, 65536.0
        %v1719 = vcvt.s32.f32 %v1716
        %v1720 = vadd.f32 %v1718, %v1719
        %v1721 = vshrl.u32 %v1569, 16
        %v1722 = vand.u32 %v1569, 65535
        %v1723 = vcvt.s32.f32 %v1721
        %v1724 = vmul.f32 %v1723, 65536.0
        %v1725 = vcvt.s32.f32 %v1722
        %v1726 = vadd.f32 %v1724, %v1725
        %v1727 = vshrl.u32 %v1570, 16
        %v1728 = vand.u32 %v1570, 65535
        %v1729 = vcvt.s32.f32 %v1727
        %v1730 = vmul.f32 %v1729, 65536.0
        %v1731 = vcvt.s32.f32 %v1728
        %v1732 = vadd.f32 %v1730, %v1731
        %v1733 = vshrl.u32 %v1571, 16
        %v1734 = vand.u32 %v1571, 65535
        %v1735 = vcvt.s32.f32 %v1733
        %v1736 = vmul.f32 %v1735, 65536.0
        %v1737 = vcvt.s32.f32 %v1734
        %v1738 = vadd.f32 %v1736, %v1737
        %v1739 = vshrl.u32 %v1572, 16
        %v1740 = vand.u32 %v1572, 65535
        %v1741 = vcvt.s32.f32 %v1739
        %v1742 = vmul.f32 %v1741, 65536.0
        %v1743 = vcvt.s32.f32 %v1740
        %v1744 = vadd.f32 %v1742, %v1743
        %v1745 = vshrl.u32 %v1573, 16
        %v1746 = vand.u32 %v1573, 65535
        %v1747 = vcvt.s32.f32 %v1745
        %v1748 = vmul.f32 %v1747, 65536.0
        %v1749 = vcvt.s32.f32 %v1746
        %v1750 = vadd.f32 %v1748, %v1749
        %v1751 = vshrl.u32 %v1574, 16
        %v1752 = vand.u32 %v1574, 65535
        %v1753 = vcvt.s32.f32 %v1751
        %v1754 = vmul.f32 %v1753, 65536.0
        %v1755 = vcvt.s32.f32 %v1752
        %v1756 = vadd.f32 %v1754, %v1755
        %v1757 = vshrl.u32 %v1575, 16
        %v1758 = vand.u32 %v1575, 65535
        %v1759 = vcvt.s32.f32 %v1757
        %v1760 = vmul.f32 %v1759, 65536.0
        %v1761 = vcvt.s32.f32 %v1758
        %v1762 = vadd.f32 %v1760, %v1761
        %v1763 = vshrl.u32 %v1576, 16
        %v1764 = vand.u32 %v1576, 65535
        %v1765 = vcvt.s32.f32 %v1763
        %v1766 = vmul.f32 %v1765, 65536.0
        %v1767 = vcvt.s32.f32 %v1764
        %v1768 = vadd.f32 %v1766, %v1767
        %v1769 = vmul.f32 %v1104, %v1582
        %v1770 = vmul.f32 %v1105, %v1588
        %v1771 = vmul.f32 %v1106, %v1594
        %v1772 = vmul.f32 %v1107, %v1600
        %v1773 = vmul.f32 %v1108, %v1606
        %v1774 = vmul.f32 %v1109, %v1612
        %v1775 = vmul.f32 %v1110, %v1618
        %v1776 = vmul.f32 %v1111, %v1624
        %v1777 = vmul.f32 %v1112, %v1630
        %v1778 = vmul.f32 %v1113, %v1636
        %v1779 = vmul.f32 %v1114, %v1642
        %v1780 = vmul.f32 %v1115, %v1648
        %v1781 = vmul.f32 %v1116, %v1654
        %v1782 = vmul.f32 %v1117, %v1660
        %v1783 = vmul.f32 %v1118, %v1666
        %v1784 = vmul.f32 %v1119, %v1672
        %v1785 = vmul.f32 %v1120, %v1678
        %v1786 = vmul.f32 %v1121, %v1684
        %v1787 = vmul.f32 %v1122, %v1690
        %v1788 = vmul.f32 %v1123, %v1696
        %v1789 = vmul.f32 %v1124, %v1702
        %v1790 = vmul.f32 %v1125, %v1708
        %v1791 = vmul.f32 %v1126, %v1714
        %v1792 = vmul.f32 %v1127, %v1720
        %v1793 = vmul.f32 %v1128, %v1726
        %v1794 = vmul.f32 %v1129, %v1732
        %v1795 = vmul.f32 %v1130, %v1738
        %v1796 = vmul.f32 %v1131, %v1744
        %v1797 = vmul.f32 %v1132, %v1750
        %v1798 = vmul.f32 %v1133, %v1756
        %v1799 = vmul.f32 %v1134, %v1762
        %v1800 = vmul.f32 %v1135, %v1768
        %1801 = vst [vmem:[%s213] sm:$0xff] %v1769
        %1802 = vst [vmem:[%s213 + $0x8] sm:$0xff] %v1770
        %1803 = vst [vmem:[%s213 + $0x10] sm:$0xff] %v1771
        %1804 = vst [vmem:[%s213 + $0x18] sm:$0xff] %v1772
        %1805 = vst [vmem:[%s213 + $0x20] sm:$0xff] %v1773
        %1806 = vst [vmem:[%s213 + $0x28] sm:$0xff] %v1774
        %1807 = vst [vmem:[%s213 + $0x30] sm:$0xff] %v1775
        %1808 = vst [vmem:[%s213 + $0x38] sm:$0xff] %v1776
        %1809 = vst [vmem:[%s213 + $0x40] sm:$0xff] %v1777
        %1810 = vst [vmem:[%s213 + $0x48] sm:$0xff] %v1778
        %1811 = vst [vmem:[%s213 + $0x50] sm:$0xff] %v1779
        %1812 = vst [vmem:[%s213 + $0x58] sm:$0xff] %v1780
        %1813 = vst [vmem:[%s213 + $0x60] sm:$0xff] %v1781
        %1814 = vst [vmem:[%s213 + $0x68] sm:$0xff] %v1782
        %1815 = vst [vmem:[%s213 + $0x70] sm:$0xff] %v1783
        %1816 = vst [vmem:[%s213 + $0x78] sm:$0xff] %v1784
        %1817 = vst [vmem:[%s213 + $0x80] sm:$0xff] %v1785
        %1818 = vst [vmem:[%s213 + $0x88] sm:$0xff] %v1786
        %1819 = vst [vmem:[%s213 + $0x90] sm:$0xff] %v1787
        %1820 = vst [vmem:[%s213 + $0x98] sm:$0xff] %v1788
        %1821 = vst [vmem:[%s213 + $0xa0] sm:$0xff] %v1789
        %1822 = vst [vmem:[%s213 + $0xa8] sm:$0xff] %v1790
        %1823 = vst [vmem:[%s213 + $0xb0] sm:$0xff] %v1791
        %1824 = vst [vmem:[%s213 + $0xb8] sm:$0xff] %v1792
        %1825 = vst [vmem:[%s213 + $0xc0] sm:$0xff] %v1793
        %1826 = vst [vmem:[%s213 + $0xc8] sm:$0xff] %v1794
        %1827 = vst [vmem:[%s213 + $0xd0] sm:$0xff] %v1795
        %1828 = vst [vmem:[%s213 + $0xd8] sm:$0xff] %v1796
        %1829 = vst [vmem:[%s213 + $0xe0] sm:$0xff] %v1797
        %1830 = vst [vmem:[%s213 + $0xe8] sm:$0xff] %v1798
        %1831 = vst [vmem:[%s213 + $0xf0] sm:$0xff] %v1799
        %1832 = vst [vmem:[%s213 + $0xf8] sm:$0xff] %v1800
        %s1833 = sand.u32 %s99, 1
        %s1834 = scalar_lea.sflag [#allocation6], %s1833
        %s1835 = sand.u32 %s99, 1
        %s1836 = smul.addr %s1835, 256
        %s1837 = scalar_lea.vmem [#allocation9], %s1836
        // Predicated region
        $region41: #{tpu_custom_call.1} parent=31 // pred_check
          %p1838 = pneg %p109
        $region42: #{tpu_custom_call.1} parent=31 // pred_check_branch
          %1840 = sbr.rel (%p1838) target = $region44
        $region43: #{tpu_custom_call.1} parent=31 // pred_region
          %s1841 = smul.u32 16, %s23
          %s1842 = ssub.s32 38, %s1841
          %p1843 = scmp.lt.s32.totalorder %s1842, 16
          %s1844 = scalar_select %p1843, %s1842, 16
          %s1845 = smul.u32 128, %s1844
          %s1846 = smul.u32 %s1845, 2
          %s1848 = ssub.s32 4096, %s1846
          %1849 = vsyncadd %s1834, %s1848
          %p1850 = scmp.ne.s32.totalorder 0, %s1846
          %s1851 = smul.addr %s1841, 2
          %s1852 = smul.addr %s1851, 128
          %s1853 = scalar_lea.hbm %s4, %s1852
          %s1854 = smul.u32 16, %s1844
          %s1855 = sshll.u32 %s1837, 4
          %s1856 = int_to_ptr.vmem [resolvable:$true] %s1855
          %s1857 = sshll.u32 %s1854, 4
          %1861 = dma.vmem_to_hbm [thread:$0]  (%p1850), %s1856, %s1857, %s1853, %s1834, 256, 256, 16
        $region44: #{tpu_custom_call.1} parent=31 // pred_fallthru
          _
      $region32: #{tpu_custom_call.1} parent=5 // pred_fallthru
        _
      %p1862 = scmp.le.s32.totalorder 2, %s18
      // Predicated region
      $region45: #{tpu_custom_call.1} parent=5 // pred_check
        %p1863 = pneg %p1862
      $region46: #{tpu_custom_call.1} parent=5 // pred_check_branch
        %1865 = sbr.rel (%p1863) target = $region48
      $region47: #{tpu_custom_call.1} parent=5 // pred_region
        %s1866 = ssub.s32 %s18, 2
        // Predicated region
        $region49: #{tpu_custom_call.1} parent=47 // pred_check
          %p1867 = pneg %p115
        $region50: #{tpu_custom_call.1} parent=47 // pred_check_branch
          %1869 = sbr.rel (%p1867) target = $region52
        $region51: #{tpu_custom_call.1} parent=47 // pred_region
          %s1870 = sand.u32 %s100, 1
          %s1871 = scalar_lea.sflag [#allocation6], %s1870
          %s1872 = sand.u32 %s100, 1
          %s1873 = smul.addr %s1872, 256
          %s1874 = scalar_lea.vmem [#allocation9], %s1873
          %1875 = dma.done %s1871, 4096
        $region52: #{tpu_custom_call.1} parent=47 // pred_fallthru
          _
      $region48: #{tpu_custom_call.1} parent=5 // pred_fallthru
        _
    $region6: #{tpu_custom_call.1} parent=1 // loop_footer
      %s22 = sadd.s32 1, %s18
    $region7: #{tpu_custom_call.1} parent=1 // loop_footer_branch
      %17 = sbr.rel target = $region3
    $region8: #{tpu_custom_call.1} parent=1 // loop_exit
      _
    %1876 = vsyncpa [#allocation5], 1
    %s1877 = scalar_lea.sflag [#allocation5], 1
    %1878 = vsyncpa %s1877, 1
    %1879 = vsyncpa [#allocation8], 1
    %1880 = vsyncpa [#allocation6], 1
    %s1881 = scalar_lea.sflag [#allocation6], 1
    %1882 = vsyncpa %s1881, 1

</llo_original>
